<compile_context>
chip_gen: v6e
topology: v6e:2x2x1
jax: 0.10.0
libtpu: 0.0.40
codegen_flags: <defaults>
</compile_context>

<pallas_src>
import jax
import jax.numpy as jnp
from jax import lax
from jax.experimental import pallas as pl
from jax.experimental.pallas import tpu as pltpu

_LANE = 128
_SUBLANE = 8


def _round_up(v, m):
    return ((v + m - 1) // m) * m


def _make_ppeg_kernel(H, W, Wpp, Ht, n_row_tiles, Bt):
    """Builds the kernel for static (H, W, Wpp, Ht, n_row_tiles, Bt)."""

    def kernel(x_ref, w_ref, b_ref, out_ref, pad_ref):
        # x_ref/out_ref: (Bt, H, W, Ct)   one batch block, one channel tile
        # w_ref:         (7, 7, Ct)       combined depthwise stencil
        # b_ref:         (1, 1, Ct)       combined bias
        # pad_ref:       (H+6, Wpp, Ct)   f32 VMEM scratch (zero halo border)
        Ct = out_ref.shape[-1]

        # Zero only the halo border strips; the interior is overwritten per batch elem.
        # Taps never read columns >= W+6, so alignment padding beyond that can stay dirty.
        zrow = jnp.zeros((3, Wpp, Ct), dtype=pad_ref.dtype)
        pad_ref[0:3, :, :] = zrow
        pad_ref[3 + H:6 + H, :, :] = zrow
        zcol = jnp.zeros((H, 3, Ct), dtype=pad_ref.dtype)
        pad_ref[3:3 + H, 0:3, :] = zcol
        pad_ref[3:3 + H, 3 + W:6 + W, :] = zcol

        # Hoist weight/bias load + cast out of the 49-tap loop (once per grid step).
        w_f32 = w_ref[...].astype(jnp.float32)      # (7, 7, Ct)
        b_f32 = b_ref[0, 0, :].astype(jnp.float32)  # (Ct,)

        def batch_body(bi, _):
            # Drop this batch element's tile into the zero-bordered interior.
            pad_ref[3:3 + H, 3:3 + W, :] = x_ref[bi].astype(pad_ref.dtype)

            def row_body(rt, _):
                # Clamp the last tile's start (overlapping rewrite is idempotent).
                r0 = jnp.minimum(rt * Ht, H - Ht)
                acc = jnp.broadcast_to(b_f32, (Ht, W, Ct))   # ~8 vregs
                # 49-tap depthwise stencil; per-tap (Ht, W, Ct) slice loaded on demand
                # from VMEM (dy on the leading axis is free; dx is a sublane-offset load).
                for dy in range(7):
                    for dx in range(7):
                        xs = pad_ref[pl.ds(r0 + dy, Ht), pl.ds(dx, W), :]
                        acc = acc + xs * w_f32[dy, dx]
                out_ref[bi, pl.ds(r0, Ht), :, :] = acc.astype(out_ref.dtype)
                return 0

            lax.fori_loop(0, n_row_tiles, row_body, 0)
            return 0

        lax.fori_loop(0, Bt, batch_body, 0)

    return kernel


def ppeg_forward(x, H, W, params):
    """x: (B, 1 + H*W, C).  Returns (B, 1 + H*W, C)."""
    B, N, C = x.shape
    assert N == 1 + H * W
    w7, b7, w5, b5, w3, b3 = params  # w*: (k, k, C), b*: (C,)

    cls_token = x[:, :1, :]
    # NHWC reshape matches the PyTorch NCHW view element-for-element.
    feat = x[:, 1:, :].reshape(B, H, W, C)

    # Fuse 7x7 + 5x5 + 3x3 depthwise kernels and the identity branch into one stencil.
    w_comb = w7.astype(jnp.float32)
    w_comb = w_comb.at[1:6, 1:6, :].add(w5.astype(jnp.float32))
    w_comb = w_comb.at[2:5, 2:5, :].add(w3.astype(jnp.float32))
    w_comb = w_comb.at[3, 3, :].add(1.0)          # "+ cnn_feat" identity term
    b_comb = (b7 + b5 + b3).astype(jnp.float32).reshape(1, 1, C)

    # Channel tile: lane-dense 128 when it divides C (the real TransMIL case),
    # otherwise one full-extent ragged tile -> no HBM-round-trip jnp.pad of the features.
    if C % _LANE == 0:
        Ct, n_ct = _LANE, C // _LANE
    else:
        Ct, n_ct = C, 1

    Hp = H + 6
    Wpp = _round_up(W + 6, _SUBLANE)
    itemsize = jnp.dtype(x.dtype).itemsize

    # Per-generation VMEM budget (v7x: 64 MiB/TC; v5e/v6e: 128 MiB).
    try:
        vmem_cap = int(pltpu.get_tpu_info().vmem_capacity_bytes)
    except Exception:  # pragma: no cover - conservative fallback
        vmem_cap = 64 << 20
    small_vmem = vmem_cap <= (64 << 20)
    step_budget = (14 << 20) if small_vmem else (28 << 20)
    vmem_cap_limit = (48 << 20) if small_vmem else (64 << 20)

    scratch_bytes = Hp * Wpp * Ct * 4

    def step_bytes(bt):
        io = bt * H * W * Ct * itemsize            # one in block + one out block
        return 4 * io + scratch_bytes + 2 * 50 * Ct * 4   # double-buffered I/O + w/b

    # Batch-block small spatial tiles to amortize the ~0.35us per-step overhead.
    Bt = 1
    if H * W <= 4096:
        for cand in (8, 4, 2):
            if B % cand == 0 and step_bytes(cand) <= step_budget:
                Bt = cand
                break
    n_b = B // Bt

    # Row tile: bound the f32 accumulator to ~8 vregs so the 49-tap loop never spills.
    Ht = max(1, min(H, (8 * 1024) // max(1, W * Ct)))
    n_row_tiles = pl.cdiv(H, Ht)

    vmem_limit = int(min(max(step_bytes(Bt) + (2 << 20), 16 << 20), vmem_cap_limit))

    kernel = _make_ppeg_kernel(H, W, Wpp, Ht, n_row_tiles, Bt)

    flops = 2 * 49 * B * H * W * C
    bytes_accessed = 2 * B * H * W * C * itemsize + 4 * (w_comb.size + b_comb.size)

    out = pl.pallas_call(
        kernel,
        out_shape=jax.ShapeDtypeStruct((B, H, W, C), x.dtype),
        grid_spec=pltpu.PrefetchScalarGridSpec(
            num_scalar_prefetch=0,
            grid=(n_b, n_ct),
            in_specs=[
                pl.BlockSpec((Bt, H, W, Ct), lambda b, c: (b, 0, 0, c)),
                pl.BlockSpec((7, 7, Ct), lambda b, c: (0, 0, c)),
                pl.BlockSpec((1, 1, Ct), lambda b, c: (0, 0, c)),
            ],
            out_specs=pl.BlockSpec((Bt, H, W, Ct), lambda b, c: (b, 0, 0, c)),
            scratch_shapes=[pltpu.VMEM((Hp, Wpp, Ct), jnp.float32)],
        ),
        compiler_params=pltpu.CompilerParams(
            dimension_semantics=("parallel", "parallel"),
            vmem_limit_bytes=vmem_limit,
        ),
        cost_estimate=pl.CostEstimate(
            flops=flops, transcendentals=0, bytes_accessed=int(bytes_accessed)),
    )(feat, w_comb, b_comb)

    out = out.reshape(B, H * W, C)
    return jnp.concatenate([cls_token, out], axis=1)


# ---------- pure-JAX reference (for correctness check only) ----------
def _depthwise_conv_ref(feat, w, b):
    # feat: (B, H, W, C), w: (k, k, C), b: (C,)
    C = feat.shape[-1]
    k = w.shape[0]
    out = lax.conv_general_dilated(
        feat, w.reshape(k, k, 1, C),
        window_strides=(1, 1), padding="SAME",
        dimension_numbers=("NHWC", "HWIO", "NHWC"),
        feature_group_count=C)
    return out + b


def ppeg_forward_ref(x, H, W, params):
    B, N, C = x.shape
    w7, b7, w5, b5, w3, b3 = params
    cls_token = x[:, :1, :]
    feat = x[:, 1:, :].reshape(B, H, W, C)
    out = (_depthwise_conv_ref(feat, w7, b7) + feat +
           _depthwise_conv_ref(feat, w5, b5) +
           _depthwise_conv_ref(feat, w3, b3))
    return jnp.concatenate([cls_token, out.reshape(B, H * W, C)], axis=1)


if __name__ == "__main__":
    B, C, H, W = 2, 32, 8, 8            # dim=32 (small synthetic stand-in for 256/512)
    N = 1 + H * W

    key = jax.random.PRNGKey(0)
    kx, k7w, k7b, k5w, k5b, k3w, k3b = jax.random.split(key, 7)

    x = jax.random.normal(kx, (B, N, C), dtype=jnp.float32)
    # Depthwise conv parameters (PyTorch shape (C,1,k,k) -> stored here as (k,k,C)).
    params = (
        jax.random.normal(k7w, (7, 7, C), dtype=jnp.float32) * 0.05,
        jax.random.normal(k7b, (C,), dtype=jnp.float32) * 0.05,
        jax.random.normal(k5w, (5, 5, C), dtype=jnp.float32) * 0.05,
        jax.random.normal(k5b, (C,), dtype=jnp.float32) * 0.05,
        jax.random.normal(k3w, (3, 3, C), dtype=jnp.float32) * 0.05,
        jax.random.normal(k3b, (C,), dtype=jnp.float32) * 0.05,
    )

    out = jax.block_until_ready(ppeg_forward(x, H, W, params))
    ref = jax.block_until_ready(ppeg_forward_ref(x, H, W, params))

    assert out.shape == (B, N, C)
    assert jnp.allclose(out, ref, atol=1e-4, rtol=1e-4), "mismatch vs reference"

    print("KERNEL_OK")
</pallas_src>

<mosaic_0001>
module attributes {stable_mosaic.version = 11 : i64} {
  func.func @kernel(%arg0: i32, %arg1: i32, %arg2: memref<2x8x8x32xf32, #tpu.memory_space<vmem>>, %arg3: memref<7x7x32xf32, #tpu.memory_space<vmem>>, %arg4: memref<1x1x32xf32, #tpu.memory_space<vmem>>, %arg5: memref<2x8x8x32xf32, #tpu.memory_space<vmem>>, %arg6: memref<14x16x32xf32, #tpu.memory_space<vmem>>) attributes {dimension_semantics = [#tpu.dimension_semantics<parallel>, #tpu.dimension_semantics<parallel>], iteration_bounds = array<i64: 1, 1>, scalar_prefetch = 0 : i64, scratch_operands = 1 : i64, tpu.core_type = #tpu.core_type<tc>, window_params = [{transform_indices = @transform_0, window_bounds = array<i64: 2, 8, 8, 32>}, {transform_indices = @transform_1, window_bounds = array<i64: 7, 7, 32>}, {transform_indices = @transform_2, window_bounds = array<i64: 1, 1, 32>}, {transform_indices = @transform_3, window_bounds = array<i64: 2, 8, 8, 32>}]} {
    %cst = arith.constant 0.000000e+00 : f32
    %0 = vector.broadcast %cst : f32 to vector<3x16x32xf32>
    %c0 = arith.constant 0 : index
    %c0_0 = arith.constant 0 : index
    %c0_1 = arith.constant 0 : index
    %1 = vector.load %arg6[%c0, %c0_0, %c0_1] : memref<14x16x32xf32, #tpu.memory_space<vmem>>, vector<3x16x32xf32>
    tpu.vector_store %arg6[%c0, %c0_0, %c0_1], %0 {strides = array<i32>} : memref<14x16x32xf32, #tpu.memory_space<vmem>>, vector<3x16x32xf32>,
    %c11 = arith.constant 11 : index
    %c0_2 = arith.constant 0 : index
    %c0_3 = arith.constant 0 : index
    %2 = vector.load %arg6[%c11, %c0_2, %c0_3] : memref<14x16x32xf32, #tpu.memory_space<vmem>>, vector<3x16x32xf32>
    tpu.vector_store %arg6[%c11, %c0_2, %c0_3], %0 {strides = array<i32>} : memref<14x16x32xf32, #tpu.memory_space<vmem>>, vector<3x16x32xf32>,
    %cst_4 = arith.constant 0.000000e+00 : f32
    %3 = vector.broadcast %cst_4 : f32 to vector<8x3x32xf32>
    %c3 = arith.constant 3 : index
    %c0_5 = arith.constant 0 : index
    %c0_6 = arith.constant 0 : index
    %4 = vector.load %arg6[%c3, %c0_5, %c0_6] : memref<14x16x32xf32, #tpu.memory_space<vmem>>, vector<8x3x32xf32>
    tpu.vector_store %arg6[%c3, %c0_5, %c0_6], %3 {strides = array<i32>} : memref<14x16x32xf32, #tpu.memory_space<vmem>>, vector<8x3x32xf32>,
    %c3_7 = arith.constant 3 : index
    %c11_8 = arith.constant 11 : index
    %c0_9 = arith.constant 0 : index
    %5 = vector.load %arg6[%c3_7, %c11_8, %c0_9] : memref<14x16x32xf32, #tpu.memory_space<vmem>>, vector<8x3x32xf32>
    tpu.vector_store %arg6[%c3_7, %c11_8, %c0_9], %3 {strides = array<i32>} : memref<14x16x32xf32, #tpu.memory_space<vmem>>, vector<8x3x32xf32>,
    %c0_10 = arith.constant 0 : index
    %c0_11 = arith.constant 0 : index
    %c0_12 = arith.constant 0 : index
    %6 = vector.load %arg3[%c0_10, %c0_11, %c0_12] : memref<7x7x32xf32, #tpu.memory_space<vmem>>, vector<7x7x32xf32>
    %c0_13 = arith.constant 0 : index
    %c0_14 = arith.constant 0 : index
    %c0_15 = arith.constant 0 : index
    %7 = vector.load %arg4[%c0_13, %c0_14, %c0_15] : memref<1x1x32xf32, #tpu.memory_space<vmem>>, vector<1x1x32xf32>
    %8 = vector.shape_cast %7 : vector<1x1x32xf32> to vector<32xf32>
    %c0_i32 = arith.constant 0 : i32
    %c2_i32 = arith.constant 2 : i32
    %9 = arith.addi %c0_i32, %c2_i32 : i32
    %c1_i32 = arith.constant 1 : i32
    scf.for %arg7 = %c0_i32 to %9 step %c1_i32  : i32 {
      %10 = arith.index_cast %arg7 : i32 to index
      %c0_17 = arith.constant 0 : index
      %c0_18 = arith.constant 0 : index
      %c0_19 = arith.constant 0 : index
      %11 = vector.load %arg2[%10, %c0_17, %c0_18, %c0_19] : memref<2x8x8x32xf32, #tpu.memory_space<vmem>>, vector<1x8x8x32xf32>
      %12 = vector.shape_cast %11 : vector<1x8x8x32xf32> to vector<8x8x32xf32>
      %c3_20 = arith.constant 3 : index
      %c3_21 = arith.constant 3 : index
      %c0_22 = arith.constant 0 : index
      %13 = vector.load %arg6[%c3_20, %c3_21, %c0_22] : memref<14x16x32xf32, #tpu.memory_space<vmem>>, vector<8x8x32xf32>
      tpu.vector_store %arg6[%c3_20, %c3_21, %c0_22], %12 {strides = array<i32>} : memref<14x16x32xf32, #tpu.memory_space<vmem>>, vector<8x8x32xf32>,
      %c0_i32_23 = arith.constant 0 : i32
      %c8_i32 = arith.constant 8 : i32
      %14 = arith.muli %c0_i32_23, %c8_i32 : i32
      %c0_i32_24 = arith.constant 0 : i32
      %15 = arith.minsi %14, %c0_i32_24 : i32
      %16 = vector.shape_cast %8 : vector<32xf32> to vector<1x1x32xf32>
      %17 = vector.broadcast %16 : vector<1x1x32xf32> to vector<8x8x32xf32>
      %c0_i32_25 = arith.constant 0 : i32
      %18 = arith.addi %15, %c0_i32_25 : i32
      %19 = arith.index_cast %18 : i32 to index
      %c0_26 = arith.constant 0 : index
      %c0_27 = arith.constant 0 : index
      %20 = vector.load %arg6[%19, %c0_26, %c0_27] : memref<14x16x32xf32, #tpu.memory_space<vmem>>, vector<8x8x32xf32>
      %21 = vector.extract_strided_slice %6 {offsets = [0, 0, 0], sizes = [1, 1, 32], strides = [1, 1, 1]} : vector<7x7x32xf32> to vector<1x1x32xf32>
      %22 = vector.shape_cast %21 : vector<1x1x32xf32> to vector<32xf32>
      %23 = vector.shape_cast %22 : vector<32xf32> to vector<1x1x32xf32>
      %24 = vector.broadcast %23 : vector<1x1x32xf32> to vector<8x8x32xf32>
      %25 = arith.mulf %20, %24 : vector<8x8x32xf32>
      %26 = arith.addf %17, %25 : vector<8x8x32xf32>
      %c0_i32_28 = arith.constant 0 : i32
      %27 = arith.addi %15, %c0_i32_28 : i32
      %28 = arith.index_cast %27 : i32 to index
      %c1 = arith.constant 1 : index
      %c0_29 = arith.constant 0 : index
      %29 = vector.load %arg6[%28, %c1, %c0_29] : memref<14x16x32xf32, #tpu.memory_space<vmem>>, vector<8x8x32xf32>
      %30 = vector.extract_strided_slice %6 {offsets = [0, 1, 0], sizes = [1, 1, 32], strides = [1, 1, 1]} : vector<7x7x32xf32> to vector<1x1x32xf32>
      %31 = vector.shape_cast %30 : vector<1x1x32xf32> to vector<32xf32>
      %32 = vector.shape_cast %31 : vector<32xf32> to vector<1x1x32xf32>
      %33 = vector.broadcast %32 : vector<1x1x32xf32> to vector<8x8x32xf32>
      %34 = arith.mulf %29, %33 : vector<8x8x32xf32>
      %35 = arith.addf %26, %34 : vector<8x8x32xf32>
      %c0_i32_30 = arith.constant 0 : i32
      %36 = arith.addi %15, %c0_i32_30 : i32
      %37 = arith.index_cast %36 : i32 to index
      %c2 = arith.constant 2 : index
      %c0_31 = arith.constant 0 : index
      %38 = vector.load %arg6[%37, %c2, %c0_31] : memref<14x16x32xf32, #tpu.memory_space<vmem>>, vector<8x8x32xf32>
      %39 = vector.extract_strided_slice %6 {offsets = [0, 2, 0], sizes = [1, 1, 32], strides = [1, 1, 1]} : vector<7x7x32xf32> to vector<1x1x32xf32>
      %40 = vector.shape_cast %39 : vector<1x1x32xf32> to vector<32xf32>
      %41 = vector.shape_cast %40 : vector<32xf32> to vector<1x1x32xf32>
      %42 = vector.broadcast %41 : vector<1x1x32xf32> to vector<8x8x32xf32>
      %43 = arith.mulf %38, %42 : vector<8x8x32xf32>
      %44 = arith.addf %35, %43 : vector<8x8x32xf32>
      %c0_i32_32 = arith.constant 0 : i32
      %45 = arith.addi %15, %c0_i32_32 : i32
      %46 = arith.index_cast %45 : i32 to index
      %c3_33 = arith.constant 3 : index
      %c0_34 = arith.constant 0 : index
      %47 = vector.load %arg6[%46, %c3_33, %c0_34] : memref<14x16x32xf32, #tpu.memory_space<vmem>>, vector<8x8x32xf32>
      %48 = vector.extract_strided_slice %6 {offsets = [0, 3, 0], sizes = [1, 1, 32], strides = [1, 1, 1]} : vector<7x7x32xf32> to vector<1x1x32xf32>
      %49 = vector.shape_cast %48 : vector<1x1x32xf32> to vector<32xf32>
      %50 = vector.shape_cast %49 : vector<32xf32> to vector<1x1x32xf32>
      %51 = vector.broadcast %50 : vector<1x1x32xf32> to vector<8x8x32xf32>
      %52 = arith.mulf %47, %51 : vector<8x8x32xf32>
      %53 = arith.addf %44, %52 : vector<8x8x32xf32>
      %c0_i32_35 = arith.constant 0 : i32
      %54 = arith.addi %15, %c0_i32_35 : i32
      %55 = arith.index_cast %54 : i32 to index
      %c4 = arith.constant 4 : index
      %c0_36 = arith.constant 0 : index
      %56 = vector.load %arg6[%55, %c4, %c0_36] : memref<14x16x32xf32, #tpu.memory_space<vmem>>, vector<8x8x32xf32>
      %57 = vector.extract_strided_slice %6 {offsets = [0, 4, 0], sizes = [1, 1, 32], strides = [1, 1, 1]} : vector<7x7x32xf32> to vector<1x1x32xf32>
      %58 = vector.shape_cast %57 : vector<1x1x32xf32> to vector<32xf32>
      %59 = vector.shape_cast %58 : vector<32xf32> to vector<1x1x32xf32>
      %60 = vector.broadcast %59 : vector<1x1x32xf32> to vector<8x8x32xf32>
      %61 = arith.mulf %56, %60 : vector<8x8x32xf32>
      %62 = arith.addf %53, %61 : vector<8x8x32xf32>
      %c0_i32_37 = arith.constant 0 : i32
      %63 = arith.addi %15, %c0_i32_37 : i32
      %64 = arith.index_cast %63 : i32 to index
      %c5 = arith.constant 5 : index
      %c0_38 = arith.constant 0 : index
      %65 = vector.load %arg6[%64, %c5, %c0_38] : memref<14x16x32xf32, #tpu.memory_space<vmem>>, vector<8x8x32xf32>
      %66 = vector.extract_strided_slice %6 {offsets = [0, 5, 0], sizes = [1, 1, 32], strides = [1, 1, 1]} : vector<7x7x32xf32> to vector<1x1x32xf32>
      %67 = vector.shape_cast %66 : vector<1x1x32xf32> to vector<32xf32>
      %68 = vector.shape_cast %67 : vector<32xf32> to vector<1x1x32xf32>
      %69 = vector.broadcast %68 : vector<1x1x32xf32> to vector<8x8x32xf32>
      %70 = arith.mulf %65, %69 : vector<8x8x32xf32>
      %71 = arith.addf %62, %70 : vector<8x8x32xf32>
      %c0_i32_39 = arith.constant 0 : i32
      %72 = arith.addi %15, %c0_i32_39 : i32
      %73 = arith.index_cast %72 : i32 to index
      %c6 = arith.constant 6 : index
      %c0_40 = arith.constant 0 : index
      %74 = vector.load %arg6[%73, %c6, %c0_40] : memref<14x16x32xf32, #tpu.memory_space<vmem>>, vector<8x8x32xf32>
      %75 = vector.extract_strided_slice %6 {offsets = [0, 6, 0], sizes = [1, 1, 32], strides = [1, 1, 1]} : vector<7x7x32xf32> to vector<1x1x32xf32>
      %76 = vector.shape_cast %75 : vector<1x1x32xf32> to vector<32xf32>
      %77 = vector.shape_cast %76 : vector<32xf32> to vector<1x1x32xf32>
      %78 = vector.broadcast %77 : vector<1x1x32xf32> to vector<8x8x32xf32>
      %79 = arith.mulf %74, %78 : vector<8x8x32xf32>
      %80 = arith.addf %71, %79 : vector<8x8x32xf32>
      %c1_i32_41 = arith.constant 1 : i32
      %81 = arith.addi %15, %c1_i32_41 : i32
      %82 = arith.index_cast %81 : i32 to index
      %c0_42 = arith.constant 0 : index
      %c0_43 = arith.constant 0 : index
      %83 = vector.load %arg6[%82, %c0_42, %c0_43] : memref<14x16x32xf32, #tpu.memory_space<vmem>>, vector<8x8x32xf32>
      %84 = vector.extract_strided_slice %6 {offsets = [1, 0, 0], sizes = [1, 1, 32], strides = [1, 1, 1]} : vector<7x7x32xf32> to vector<1x1x32xf32>
      %85 = vector.shape_cast %84 : vector<1x1x32xf32> to vector<32xf32>
      %86 = vector.shape_cast %85 : vector<32xf32> to vector<1x1x32xf32>
      %87 = vector.broadcast %86 : vector<1x1x32xf32> to vector<8x8x32xf32>
      %88 = arith.mulf %83, %87 : vector<8x8x32xf32>
      %89 = arith.addf %80, %88 : vector<8x8x32xf32>
      %c1_i32_44 = arith.constant 1 : i32
      %90 = arith.addi %15, %c1_i32_44 : i32
      %91 = arith.index_cast %90 : i32 to index
      %c1_45 = arith.constant 1 : index
      %c0_46 = arith.constant 0 : index
      %92 = vector.load %arg6[%91, %c1_45, %c0_46] : memref<14x16x32xf32, #tpu.memory_space<vmem>>, vector<8x8x32xf32>
      %93 = vector.extract_strided_slice %6 {offsets = [1, 1, 0], sizes = [1, 1, 32], strides = [1, 1, 1]} : vector<7x7x32xf32> to vector<1x1x32xf32>
      %94 = vector.shape_cast %93 : vector<1x1x32xf32> to vector<32xf32>
      %95 = vector.shape_cast %94 : vector<32xf32> to vector<1x1x32xf32>
      %96 = vector.broadcast %95 : vector<1x1x32xf32> to vector<8x8x32xf32>
      %97 = arith.mulf %92, %96 : vector<8x8x32xf32>
      %98 = arith.addf %89, %97 : vector<8x8x32xf32>
      %c1_i32_47 = arith.constant 1 : i32
      %99 = arith.addi %15, %c1_i32_47 : i32
      %100 = arith.index_cast %99 : i32 to index
      %c2_48 = arith.constant 2 : index
      %c0_49 = arith.constant 0 : index
      %101 = vector.load %arg6[%100, %c2_48, %c0_49] : memref<14x16x32xf32, #tpu.memory_space<vmem>>, vector<8x8x32xf32>
      %102 = vector.extract_strided_slice %6 {offsets = [1, 2, 0], sizes = [1, 1, 32], strides = [1, 1, 1]} : vector<7x7x32xf32> to vector<1x1x32xf32>
      %103 = vector.shape_cast %102 : vector<1x1x32xf32> to vector<32xf32>
      %104 = vector.shape_cast %103 : vector<32xf32> to vector<1x1x32xf32>
      %105 = vector.broadcast %104 : vector<1x1x32xf32> to vector<8x8x32xf32>
      %106 = arith.mulf %101, %105 : vector<8x8x32xf32>
      %107 = arith.addf %98, %106 : vector<8x8x32xf32>
      %c1_i32_50 = arith.constant 1 : i32
      %108 = arith.addi %15, %c1_i32_50 : i32
      %109 = arith.index_cast %108 : i32 to index
      %c3_51 = arith.constant 3 : index
      %c0_52 = arith.constant 0 : index
      %110 = vector.load %arg6[%109, %c3_51, %c0_52] : memref<14x16x32xf32, #tpu.memory_space<vmem>>, vector<8x8x32xf32>
      %111 = vector.extract_strided_slice %6 {offsets = [1, 3, 0], sizes = [1, 1, 32], strides = [1, 1, 1]} : vector<7x7x32xf32> to vector<1x1x32xf32>
      %112 = vector.shape_cast %111 : vector<1x1x32xf32> to vector<32xf32>
      %113 = vector.shape_cast %112 : vector<32xf32> to vector<1x1x32xf32>
      %114 = vector.broadcast %113 : vector<1x1x32xf32> to vector<8x8x32xf32>
      %115 = arith.mulf %110, %114 : vector<8x8x32xf32>
      %116 = arith.addf %107, %115 : vector<8x8x32xf32>
      %c1_i32_53 = arith.constant 1 : i32
      %117 = arith.addi %15, %c1_i32_53 : i32
      %118 = arith.index_cast %117 : i32 to index
      %c4_54 = arith.constant 4 : index
      %c0_55 = arith.constant 0 : index
      %119 = vector.load %arg6[%118, %c4_54, %c0_55] : memref<14x16x32xf32, #tpu.memory_space<vmem>>, vector<8x8x32xf32>
      %120 = vector.extract_strided_slice %6 {offsets = [1, 4, 0], sizes = [1, 1, 32], strides = [1, 1, 1]} : vector<7x7x32xf32> to vector<1x1x32xf32>
      %121 = vector.shape_cast %120 : vector<1x1x32xf32> to vector<32xf32>
      %122 = vector.shape_cast %121 : vector<32xf32> to vector<1x1x32xf32>
      %123 = vector.broadcast %122 : vector<1x1x32xf32> to vector<8x8x32xf32>
      %124 = arith.mulf %119, %123 : vector<8x8x32xf32>
      %125 = arith.addf %116, %124 : vector<8x8x32xf32>
      %c1_i32_56 = arith.constant 1 : i32
      %126 = arith.addi %15, %c1_i32_56 : i32
      %127 = arith.index_cast %126 : i32 to index
      %c5_57 = arith.constant 5 : index
      %c0_58 = arith.constant 0 : index
      %128 = vector.load %arg6[%127, %c5_57, %c0_58] : memref<14x16x32xf32, #tpu.memory_space<vmem>>, vector<8x8x32xf32>
      %129 = vector.extract_strided_slice %6 {offsets = [1, 5, 0], sizes = [1, 1, 32], strides = [1, 1, 1]} : vector<7x7x32xf32> to vector<1x1x32xf32>
      %130 = vector.shape_cast %129 : vector<1x1x32xf32> to vector<32xf32>
      %131 = vector.shape_cast %130 : vector<32xf32> to vector<1x1x32xf32>
      %132 = vector.broadcast %131 : vector<1x1x32xf32> to vector<8x8x32xf32>
      %133 = arith.mulf %128, %132 : vector<8x8x32xf32>
      %134 = arith.addf %125, %133 : vector<8x8x32xf32>
      %c1_i32_59 = arith.constant 1 : i32
      %135 = arith.addi %15, %c1_i32_59 : i32
      %136 = arith.index_cast %135 : i32 to index
      %c6_60 = arith.constant 6 : index
      %c0_61 = arith.constant 0 : index
      %137 = vector.load %arg6[%136, %c6_60, %c0_61] : memref<14x16x32xf32, #tpu.memory_space<vmem>>, vector<8x8x32xf32>
      %138 = vector.extract_strided_slice %6 {offsets = [1, 6, 0], sizes = [1, 1, 32], strides = [1, 1, 1]} : vector<7x7x32xf32> to vector<1x1x32xf32>
      %139 = vector.shape_cast %138 : vector<1x1x32xf32> to vector<32xf32>
      %140 = vector.shape_cast %139 : vector<32xf32> to vector<1x1x32xf32>
      %141 = vector.broadcast %140 : vector<1x1x32xf32> to vector<8x8x32xf32>
      %142 = arith.mulf %137, %141 : vector<8x8x32xf32>
      %143 = arith.addf %134, %142 : vector<8x8x32xf32>
      %c2_i32_62 = arith.constant 2 : i32
      %144 = arith.addi %15, %c2_i32_62 : i32
      %145 = arith.index_cast %144 : i32 to index
      %c0_63 = arith.constant 0 : index
      %c0_64 = arith.constant 0 : index
      %146 = vector.load %arg6[%145, %c0_63, %c0_64] : memref<14x16x32xf32, #tpu.memory_space<vmem>>, vector<8x8x32xf32>
      %147 = vector.extract_strided_slice %6 {offsets = [2, 0, 0], sizes = [1, 1, 32], strides = [1, 1, 1]} : vector<7x7x32xf32> to vector<1x1x32xf32>
      %148 = vector.shape_cast %147 : vector<1x1x32xf32> to vector<32xf32>
      %149 = vector.shape_cast %148 : vector<32xf32> to vector<1x1x32xf32>
      %150 = vector.broadcast %149 : vector<1x1x32xf32> to vector<8x8x32xf32>
      %151 = arith.mulf %146, %150 : vector<8x8x32xf32>
      %152 = arith.addf %143, %151 : vector<8x8x32xf32>
      %c2_i32_65 = arith.constant 2 : i32
      %153 = arith.addi %15, %c2_i32_65 : i32
      %154 = arith.index_cast %153 : i32 to index
      %c1_66 = arith.constant 1 : index
      %c0_67 = arith.constant 0 : index
      %155 = vector.load %arg6[%154, %c1_66, %c0_67] : memref<14x16x32xf32, #tpu.memory_space<vmem>>, vector<8x8x32xf32>
      %156 = vector.extract_strided_slice %6 {offsets = [2, 1, 0], sizes = [1, 1, 32], strides = [1, 1, 1]} : vector<7x7x32xf32> to vector<1x1x32xf32>
      %157 = vector.shape_cast %156 : vector<1x1x32xf32> to vector<32xf32>
      %158 = vector.shape_cast %157 : vector<32xf32> to vector<1x1x32xf32>
      %159 = vector.broadcast %158 : vector<1x1x32xf32> to vector<8x8x32xf32>
      %160 = arith.mulf %155, %159 : vector<8x8x32xf32>
      %161 = arith.addf %152, %160 : vector<8x8x32xf32>
      %c2_i32_68 = arith.constant 2 : i32
      %162 = arith.addi %15, %c2_i32_68 : i32
      %163 = arith.index_cast %162 : i32 to index
      %c2_69 = arith.constant 2 : index
      %c0_70 = arith.constant 0 : index
      %164 = vector.load %arg6[%163, %c2_69, %c0_70] : memref<14x16x32xf32, #tpu.memory_space<vmem>>, vector<8x8x32xf32>
      %165 = vector.extract_strided_slice %6 {offsets = [2, 2, 0], sizes = [1, 1, 32], strides = [1, 1, 1]} : vector<7x7x32xf32> to vector<1x1x32xf32>
      %166 = vector.shape_cast %165 : vector<1x1x32xf32> to vector<32xf32>
      %167 = vector.shape_cast %166 : vector<32xf32> to vector<1x1x32xf32>
      %168 = vector.broadcast %167 : vector<1x1x32xf32> to vector<8x8x32xf32>
      %169 = arith.mulf %164, %168 : vector<8x8x32xf32>
      %170 = arith.addf %161, %169 : vector<8x8x32xf32>
      %c2_i32_71 = arith.constant 2 : i32
      %171 = arith.addi %15, %c2_i32_71 : i32
      %172 = arith.index_cast %171 : i32 to index
      %c3_72 = arith.constant 3 : index
      %c0_73 = arith.constant 0 : index
      %173 = vector.load %arg6[%172, %c3_72, %c0_73] : memref<14x16x32xf32, #tpu.memory_space<vmem>>, vector<8x8x32xf32>
      %174 = vector.extract_strided_slice %6 {offsets = [2, 3, 0], sizes = [1, 1, 32], strides = [1, 1, 1]} : vector<7x7x32xf32> to vector<1x1x32xf32>
      %175 = vector.shape_cast %174 : vector<1x1x32xf32> to vector<32xf32>
      %176 = vector.shape_cast %175 : vector<32xf32> to vector<1x1x32xf32>
      %177 = vector.broadcast %176 : vector<1x1x32xf32> to vector<8x8x32xf32>
      %178 = arith.mulf %173, %177 : vector<8x8x32xf32>
      %179 = arith.addf %170, %178 : vector<8x8x32xf32>
      %c2_i32_74 = arith.constant 2 : i32
      %180 = arith.addi %15, %c2_i32_74 : i32
      %181 = arith.index_cast %180 : i32 to index
      %c4_75 = arith.constant 4 : index
      %c0_76 = arith.constant 0 : index
      %182 = vector.load %arg6[%181, %c4_75, %c0_76] : memref<14x16x32xf32, #tpu.memory_space<vmem>>, vector<8x8x32xf32>
      %183 = vector.extract_strided_slice %6 {offsets = [2, 4, 0], sizes = [1, 1, 32], strides = [1, 1, 1]} : vector<7x7x32xf32> to vector<1x1x32xf32>
      %184 = vector.shape_cast %183 : vector<1x1x32xf32> to vector<32xf32>
      %185 = vector.shape_cast %184 : vector<32xf32> to vector<1x1x32xf32>
      %186 = vector.broadcast %185 : vector<1x1x32xf32> to vector<8x8x32xf32>
      %187 = arith.mulf %182, %186 : vector<8x8x32xf32>
      %188 = arith.addf %179, %187 : vector<8x8x32xf32>
      %c2_i32_77 = arith.constant 2 : i32
      %189 = arith.addi %15, %c2_i32_77 : i32
      %190 = arith.index_cast %189 : i32 to index
      %c5_78 = arith.constant 5 : index
      %c0_79 = arith.constant 0 : index
      %191 = vector.load %arg6[%190, %c5_78, %c0_79] : memref<14x16x32xf32, #tpu.memory_space<vmem>>, vector<8x8x32xf32>
      %192 = vector.extract_strided_slice %6 {offsets = [2, 5, 0], sizes = [1, 1, 32], strides = [1, 1, 1]} : vector<7x7x32xf32> to vector<1x1x32xf32>
      %193 = vector.shape_cast %192 : vector<1x1x32xf32> to vector<32xf32>
      %194 = vector.shape_cast %193 : vector<32xf32> to vector<1x1x32xf32>
      %195 = vector.broadcast %194 : vector<1x1x32xf32> to vector<8x8x32xf32>
      %196 = arith.mulf %191, %195 : vector<8x8x32xf32>
      %197 = arith.addf %188, %196 : vector<8x8x32xf32>
      %c2_i32_80 = arith.constant 2 : i32
      %198 = arith.addi %15, %c2_i32_80 : i32
      %199 = arith.index_cast %198 : i32 to index
      %c6_81 = arith.constant 6 : index
      %c0_82 = arith.constant 0 : index
      %200 = vector.load %arg6[%199, %c6_81, %c0_82] : memref<14x16x32xf32, #tpu.memory_space<vmem>>, vector<8x8x32xf32>
      %201 = vector.extract_strided_slice %6 {offsets = [2, 6, 0], sizes = [1, 1, 32], strides = [1, 1, 1]} : vector<7x7x32xf32> to vector<1x1x32xf32>
      %202 = vector.shape_cast %201 : vector<1x1x32xf32> to vector<32xf32>
      %203 = vector.shape_cast %202 : vector<32xf32> to vector<1x1x32xf32>
      %204 = vector.broadcast %203 : vector<1x1x32xf32> to vector<8x8x32xf32>
      %205 = arith.mulf %200, %204 : vector<8x8x32xf32>
      %206 = arith.addf %197, %205 : vector<8x8x32xf32>
      %c3_i32 = arith.constant 3 : i32
      %207 = arith.addi %15, %c3_i32 : i32
      %208 = arith.index_cast %207 : i32 to index
      %c0_83 = arith.constant 0 : index
      %c0_84 = arith.constant 0 : index
      %209 = vector.load %arg6[%208, %c0_83, %c0_84] : memref<14x16x32xf32, #tpu.memory_space<vmem>>, vector<8x8x32xf32>
      %210 = vector.extract_strided_slice %6 {offsets = [3, 0, 0], sizes = [1, 1, 32], strides = [1, 1, 1]} : vector<7x7x32xf32> to vector<1x1x32xf32>
      %211 = vector.shape_cast %210 : vector<1x1x32xf32> to vector<32xf32>
      %212 = vector.shape_cast %211 : vector<32xf32> to vector<1x1x32xf32>
      %213 = vector.broadcast %212 : vector<1x1x32xf32> to vector<8x8x32xf32>
      %214 = arith.mulf %209, %213 : vector<8x8x32xf32>
      %215 = arith.addf %206, %214 : vector<8x8x32xf32>
      %c3_i32_85 = arith.constant 3 : i32
      %216 = arith.addi %15, %c3_i32_85 : i32
      %217 = arith.index_cast %216 : i32 to index
      %c1_86 = arith.constant 1 : index
      %c0_87 = arith.constant 0 : index
      %218 = vector.load %arg6[%217, %c1_86, %c0_87] : memref<14x16x32xf32, #tpu.memory_space<vmem>>, vector<8x8x32xf32>
      %219 = vector.extract_strided_slice %6 {offsets = [3, 1, 0], sizes = [1, 1, 32], strides = [1, 1, 1]} : vector<7x7x32xf32> to vector<1x1x32xf32>
      %220 = vector.shape_cast %219 : vector<1x1x32xf32> to vector<32xf32>
      %221 = vector.shape_cast %220 : vector<32xf32> to vector<1x1x32xf32>
      %222 = vector.broadcast %221 : vector<1x1x32xf32> to vector<8x8x32xf32>
      %223 = arith.mulf %218, %222 : vector<8x8x32xf32>
      %224 = arith.addf %215, %223 : vector<8x8x32xf32>
      %c3_i32_88 = arith.constant 3 : i32
      %225 = arith.addi %15, %c3_i32_88 : i32
      %226 = arith.index_cast %225 : i32 to index
      %c2_89 = arith.constant 2 : index
      %c0_90 = arith.constant 0 : index
      %227 = vector.load %arg6[%226, %c2_89, %c0_90] : memref<14x16x32xf32, #tpu.memory_space<vmem>>, vector<8x8x32xf32>
      %228 = vector.extract_strided_slice %6 {offsets = [3, 2, 0], sizes = [1, 1, 32], strides = [1, 1, 1]} : vector<7x7x32xf32> to vector<1x1x32xf32>
      %229 = vector.shape_cast %228 : vector<1x1x32xf32> to vector<32xf32>
      %230 = vector.shape_cast %229 : vector<32xf32> to vector<1x1x32xf32>
      %231 = vector.broadcast %230 : vector<1x1x32xf32> to vector<8x8x32xf32>
      %232 = arith.mulf %227, %231 : vector<8x8x32xf32>
      %233 = arith.addf %224, %232 : vector<8x8x32xf32>
      %c3_i32_91 = arith.constant 3 : i32
      %234 = arith.addi %15, %c3_i32_91 : i32
      %235 = arith.index_cast %234 : i32 to index
      %c3_92 = arith.constant 3 : index
      %c0_93 = arith.constant 0 : index
      %236 = vector.load %arg6[%235, %c3_92, %c0_93] : memref<14x16x32xf32, #tpu.memory_space<vmem>>, vector<8x8x32xf32>
      %237 = vector.extract_strided_slice %6 {offsets = [3, 3, 0], sizes = [1, 1, 32], strides = [1, 1, 1]} : vector<7x7x32xf32> to vector<1x1x32xf32>
      %238 = vector.shape_cast %237 : vector<1x1x32xf32> to vector<32xf32>
      %239 = vector.shape_cast %238 : vector<32xf32> to vector<1x1x32xf32>
      %240 = vector.broadcast %239 : vector<1x1x32xf32> to vector<8x8x32xf32>
      %241 = arith.mulf %236, %240 : vector<8x8x32xf32>
      %242 = arith.addf %233, %241 : vector<8x8x32xf32>
      %c3_i32_94 = arith.constant 3 : i32
      %243 = arith.addi %15, %c3_i32_94 : i32
      %244 = arith.index_cast %243 : i32 to index
      %c4_95 = arith.constant 4 : index
      %c0_96 = arith.constant 0 : index
      %245 = vector.load %arg6[%244, %c4_95, %c0_96] : memref<14x16x32xf32, #tpu.memory_space<vmem>>, vector<8x8x32xf32>
      %246 = vector.extract_strided_slice %6 {offsets = [3, 4, 0], sizes = [1, 1, 32], strides = [1, 1, 1]} : vector<7x7x32xf32> to vector<1x1x32xf32>
      %247 = vector.shape_cast %246 : vector<1x1x32xf32> to vector<32xf32>
      %248 = vector.shape_cast %247 : vector<32xf32> to vector<1x1x32xf32>
      %249 = vector.broadcast %248 : vector<1x1x32xf32> to vector<8x8x32xf32>
      %250 = arith.mulf %245, %249 : vector<8x8x32xf32>
      %251 = arith.addf %242, %250 : vector<8x8x32xf32>
      %c3_i32_97 = arith.constant 3 : i32
      %252 = arith.addi %15, %c3_i32_97 : i32
      %253 = arith.index_cast %252 : i32 to index
      %c5_98 = arith.constant 5 : index
      %c0_99 = arith.constant 0 : index
      %254 = vector.load %arg6[%253, %c5_98, %c0_99] : memref<14x16x32xf32, #tpu.memory_space<vmem>>, vector<8x8x32xf32>
      %255 = vector.extract_strided_slice %6 {offsets = [3, 5, 0], sizes = [1, 1, 32], strides = [1, 1, 1]} : vector<7x7x32xf32> to vector<1x1x32xf32>
      %256 = vector.shape_cast %255 : vector<1x1x32xf32> to vector<32xf32>
      %257 = vector.shape_cast %256 : vector<32xf32> to vector<1x1x32xf32>
      %258 = vector.broadcast %257 : vector<1x1x32xf32> to vector<8x8x32xf32>
      %259 = arith.mulf %254, %258 : vector<8x8x32xf32>
      %260 = arith.addf %251, %259 : vector<8x8x32xf32>
      %c3_i32_100 = arith.constant 3 : i32
      %261 = arith.addi %15, %c3_i32_100 : i32
      %262 = arith.index_cast %261 : i32 to index
      %c6_101 = arith.constant 6 : index
      %c0_102 = arith.constant 0 : index
      %263 = vector.load %arg6[%262, %c6_101, %c0_102] : memref<14x16x32xf32, #tpu.memory_space<vmem>>, vector<8x8x32xf32>
      %264 = vector.extract_strided_slice %6 {offsets = [3, 6, 0], sizes = [1, 1, 32], strides = [1, 1, 1]} : vector<7x7x32xf32> to vector<1x1x32xf32>
      %265 = vector.shape_cast %264 : vector<1x1x32xf32> to vector<32xf32>
      %266 = vector.shape_cast %265 : vector<32xf32> to vector<1x1x32xf32>
      %267 = vector.broadcast %266 : vector<1x1x32xf32> to vector<8x8x32xf32>
      %268 = arith.mulf %263, %267 : vector<8x8x32xf32>
      %269 = arith.addf %260, %268 : vector<8x8x32xf32>
      %c4_i32 = arith.constant 4 : i32
      %270 = arith.addi %15, %c4_i32 : i32
      %271 = arith.index_cast %270 : i32 to index
      %c0_103 = arith.constant 0 : index
      %c0_104 = arith.constant 0 : index
      %272 = vector.load %arg6[%271, %c0_103, %c0_104] : memref<14x16x32xf32, #tpu.memory_space<vmem>>, vector<8x8x32xf32>
      %273 = vector.extract_strided_slice %6 {offsets = [4, 0, 0], sizes = [1, 1, 32], strides = [1, 1, 1]} : vector<7x7x32xf32> to vector<1x1x32xf32>
      %274 = vector.shape_cast %273 : vector<1x1x32xf32> to vector<32xf32>
      %275 = vector.shape_cast %274 : vector<32xf32> to vector<1x1x32xf32>
      %276 = vector.broadcast %275 : vector<1x1x32xf32> to vector<8x8x32xf32>
      %277 = arith.mulf %272, %276 : vector<8x8x32xf32>
      %278 = arith.addf %269, %277 : vector<8x8x32xf32>
      %c4_i32_105 = arith.constant 4 : i32
      %279 = arith.addi %15, %c4_i32_105 : i32
      %280 = arith.index_cast %279 : i32 to index
      %c1_106 = arith.constant 1 : index
      %c0_107 = arith.constant 0 : index
      %281 = vector.load %arg6[%280, %c1_106, %c0_107] : memref<14x16x32xf32, #tpu.memory_space<vmem>>, vector<8x8x32xf32>
      %282 = vector.extract_strided_slice %6 {offsets = [4, 1, 0], sizes = [1, 1, 32], strides = [1, 1, 1]} : vector<7x7x32xf32> to vector<1x1x32xf32>
      %283 = vector.shape_cast %282 : vector<1x1x32xf32> to vector<32xf32>
      %284 = vector.shape_cast %283 : vector<32xf32> to vector<1x1x32xf32>
      %285 = vector.broadcast %284 : vector<1x1x32xf32> to vector<8x8x32xf32>
      %286 = arith.mulf %281, %285 : vector<8x8x32xf32>
      %287 = arith.addf %278, %286 : vector<8x8x32xf32>
      %c4_i32_108 = arith.constant 4 : i32
      %288 = arith.addi %15, %c4_i32_108 : i32
      %289 = arith.index_cast %288 : i32 to index
      %c2_109 = arith.constant 2 : index
      %c0_110 = arith.constant 0 : index
      %290 = vector.load %arg6[%289, %c2_109, %c0_110] : memref<14x16x32xf32, #tpu.memory_space<vmem>>, vector<8x8x32xf32>
      %291 = vector.extract_strided_slice %6 {offsets = [4, 2, 0], sizes = [1, 1, 32], strides = [1, 1, 1]} : vector<7x7x32xf32> to vector<1x1x32xf32>
      %292 = vector.shape_cast %291 : vector<1x1x32xf32> to vector<32xf32>
      %293 = vector.shape_cast %292 : vector<32xf32> to vector<1x1x32xf32>
      %294 = vector.broadcast %293 : vector<1x1x32xf32> to vector<8x8x32xf32>
      %295 = arith.mulf %290, %294 : vector<8x8x32xf32>
      %296 = arith.addf %287, %295 : vector<8x8x32xf32>
      %c4_i32_111 = arith.constant 4 : i32
      %297 = arith.addi %15, %c4_i32_111 : i32
      %298 = arith.index_cast %297 : i32 to index
      %c3_112 = arith.constant 3 : index
      %c0_113 = arith.constant 0 : index
      %299 = vector.load %arg6[%298, %c3_112, %c0_113] : memref<14x16x32xf32, #tpu.memory_space<vmem>>, vector<8x8x32xf32>
      %300 = vector.extract_strided_slice %6 {offsets = [4, 3, 0], sizes = [1, 1, 32], strides = [1, 1, 1]} : vector<7x7x32xf32> to vector<1x1x32xf32>
      %301 = vector.shape_cast %300 : vector<1x1x32xf32> to vector<32xf32>
      %302 = vector.shape_cast %301 : vector<32xf32> to vector<1x1x32xf32>
      %303 = vector.broadcast %302 : vector<1x1x32xf32> to vector<8x8x32xf32>
      %304 = arith.mulf %299, %303 : vector<8x8x32xf32>
      %305 = arith.addf %296, %304 : vector<8x8x32xf32>
      %c4_i32_114 = arith.constant 4 : i32
      %306 = arith.addi %15, %c4_i32_114 : i32
      %307 = arith.index_cast %306 : i32 to index
      %c4_115 = arith.constant 4 : index
      %c0_116 = arith.constant 0 : index
      %308 = vector.load %arg6[%307, %c4_115, %c0_116] : memref<14x16x32xf32, #tpu.memory_space<vmem>>, vector<8x8x32xf32>
      %309 = vector.extract_strided_slice %6 {offsets = [4, 4, 0], sizes = [1, 1, 32], strides = [1, 1, 1]} : vector<7x7x32xf32> to vector<1x1x32xf32>
      %310 = vector.shape_cast %309 : vector<1x1x32xf32> to vector<32xf32>
      %311 = vector.shape_cast %310 : vector<32xf32> to vector<1x1x32xf32>
      %312 = vector.broadcast %311 : vector<1x1x32xf32> to vector<8x8x32xf32>
      %313 = arith.mulf %308, %312 : vector<8x8x32xf32>
      %314 = arith.addf %305, %313 : vector<8x8x32xf32>
      %c4_i32_117 = arith.constant 4 : i32
      %315 = arith.addi %15, %c4_i32_117 : i32
      %316 = arith.index_cast %315 : i32 to index
      %c5_118 = arith.constant 5 : index
      %c0_119 = arith.constant 0 : index
      %317 = vector.load %arg6[%316, %c5_118, %c0_119] : memref<14x16x32xf32, #tpu.memory_space<vmem>>, vector<8x8x32xf32>
      %318 = vector.extract_strided_slice %6 {offsets = [4, 5, 0], sizes = [1, 1, 32], strides = [1, 1, 1]} : vector<7x7x32xf32> to vector<1x1x32xf32>
      %319 = vector.shape_cast %318 : vector<1x1x32xf32> to vector<32xf32>
      %320 = vector.shape_cast %319 : vector<32xf32> to vector<1x1x32xf32>
      %321 = vector.broadcast %320 : vector<1x1x32xf32> to vector<8x8x32xf32>
      %322 = arith.mulf %317, %321 : vector<8x8x32xf32>
      %323 = arith.addf %314, %322 : vector<8x8x32xf32>
      %c4_i32_120 = arith.constant 4 : i32
      %324 = arith.addi %15, %c4_i32_120 : i32
      %325 = arith.index_cast %324 : i32 to index
      %c6_121 = arith.constant 6 : index
      %c0_122 = arith.constant 0 : index
      %326 = vector.load %arg6[%325, %c6_121, %c0_122] : memref<14x16x32xf32, #tpu.memory_space<vmem>>, vector<8x8x32xf32>
      %327 = vector.extract_strided_slice %6 {offsets = [4, 6, 0], sizes = [1, 1, 32], strides = [1, 1, 1]} : vector<7x7x32xf32> to vector<1x1x32xf32>
      %328 = vector.shape_cast %327 : vector<1x1x32xf32> to vector<32xf32>
      %329 = vector.shape_cast %328 : vector<32xf32> to vector<1x1x32xf32>
      %330 = vector.broadcast %329 : vector<1x1x32xf32> to vector<8x8x32xf32>
      %331 = arith.mulf %326, %330 : vector<8x8x32xf32>
      %332 = arith.addf %323, %331 : vector<8x8x32xf32>
      %c5_i32 = arith.constant 5 : i32
      %333 = arith.addi %15, %c5_i32 : i32
      %334 = arith.index_cast %333 : i32 to index
      %c0_123 = arith.constant 0 : index
      %c0_124 = arith.constant 0 : index
      %335 = vector.load %arg6[%334, %c0_123, %c0_124] : memref<14x16x32xf32, #tpu.memory_space<vmem>>, vector<8x8x32xf32>
      %336 = vector.extract_strided_slice %6 {offsets = [5, 0, 0], sizes = [1, 1, 32], strides = [1, 1, 1]} : vector<7x7x32xf32> to vector<1x1x32xf32>
      %337 = vector.shape_cast %336 : vector<1x1x32xf32> to vector<32xf32>
      %338 = vector.shape_cast %337 : vector<32xf32> to vector<1x1x32xf32>
      %339 = vector.broadcast %338 : vector<1x1x32xf32> to vector<8x8x32xf32>
      %340 = arith.mulf %335, %339 : vector<8x8x32xf32>
      %341 = arith.addf %332, %340 : vector<8x8x32xf32>
      %c5_i32_125 = arith.constant 5 : i32
      %342 = arith.addi %15, %c5_i32_125 : i32
      %343 = arith.index_cast %342 : i32 to index
      %c1_126 = arith.constant 1 : index
      %c0_127 = arith.constant 0 : index
      %344 = vector.load %arg6[%343, %c1_126, %c0_127] : memref<14x16x32xf32, #tpu.memory_space<vmem>>, vector<8x8x32xf32>
      %345 = vector.extract_strided_slice %6 {offsets = [5, 1, 0], sizes = [1, 1, 32], strides = [1, 1, 1]} : vector<7x7x32xf32> to vector<1x1x32xf32>
      %346 = vector.shape_cast %345 : vector<1x1x32xf32> to vector<32xf32>
      %347 = vector.shape_cast %346 : vector<32xf32> to vector<1x1x32xf32>
      %348 = vector.broadcast %347 : vector<1x1x32xf32> to vector<8x8x32xf32>
      %349 = arith.mulf %344, %348 : vector<8x8x32xf32>
      %350 = arith.addf %341, %349 : vector<8x8x32xf32>
      %c5_i32_128 = arith.constant 5 : i32
      %351 = arith.addi %15, %c5_i32_128 : i32
      %352 = arith.index_cast %351 : i32 to index
      %c2_129 = arith.constant 2 : index
      %c0_130 = arith.constant 0 : index
      %353 = vector.load %arg6[%352, %c2_129, %c0_130] : memref<14x16x32xf32, #tpu.memory_space<vmem>>, vector<8x8x32xf32>
      %354 = vector.extract_strided_slice %6 {offsets = [5, 2, 0], sizes = [1, 1, 32], strides = [1, 1, 1]} : vector<7x7x32xf32> to vector<1x1x32xf32>
      %355 = vector.shape_cast %354 : vector<1x1x32xf32> to vector<32xf32>
      %356 = vector.shape_cast %355 : vector<32xf32> to vector<1x1x32xf32>
      %357 = vector.broadcast %356 : vector<1x1x32xf32> to vector<8x8x32xf32>
      %358 = arith.mulf %353, %357 : vector<8x8x32xf32>
      %359 = arith.addf %350, %358 : vector<8x8x32xf32>
      %c5_i32_131 = arith.constant 5 : i32
      %360 = arith.addi %15, %c5_i32_131 : i32
      %361 = arith.index_cast %360 : i32 to index
      %c3_132 = arith.constant 3 : index
      %c0_133 = arith.constant 0 : index
      %362 = vector.load %arg6[%361, %c3_132, %c0_133] : memref<14x16x32xf32, #tpu.memory_space<vmem>>, vector<8x8x32xf32>
      %363 = vector.extract_strided_slice %6 {offsets = [5, 3, 0], sizes = [1, 1, 32], strides = [1, 1, 1]} : vector<7x7x32xf32> to vector<1x1x32xf32>
      %364 = vector.shape_cast %363 : vector<1x1x32xf32> to vector<32xf32>
      %365 = vector.shape_cast %364 : vector<32xf32> to vector<1x1x32xf32>
      %366 = vector.broadcast %365 : vector<1x1x32xf32> to vector<8x8x32xf32>
      %367 = arith.mulf %362, %366 : vector<8x8x32xf32>
      %368 = arith.addf %359, %367 : vector<8x8x32xf32>
      %c5_i32_134 = arith.constant 5 : i32
      %369 = arith.addi %15, %c5_i32_134 : i32
      %370 = arith.index_cast %369 : i32 to index
      %c4_135 = arith.constant 4 : index
      %c0_136 = arith.constant 0 : index
      %371 = vector.load %arg6[%370, %c4_135, %c0_136] : memref<14x16x32xf32, #tpu.memory_space<vmem>>, vector<8x8x32xf32>
      %372 = vector.extract_strided_slice %6 {offsets = [5, 4, 0], sizes = [1, 1, 32], strides = [1, 1, 1]} : vector<7x7x32xf32> to vector<1x1x32xf32>
      %373 = vector.shape_cast %372 : vector<1x1x32xf32> to vector<32xf32>
      %374 = vector.shape_cast %373 : vector<32xf32> to vector<1x1x32xf32>
      %375 = vector.broadcast %374 : vector<1x1x32xf32> to vector<8x8x32xf32>
      %376 = arith.mulf %371, %375 : vector<8x8x32xf32>
      %377 = arith.addf %368, %376 : vector<8x8x32xf32>
      %c5_i32_137 = arith.constant 5 : i32
      %378 = arith.addi %15, %c5_i32_137 : i32
      %379 = arith.index_cast %378 : i32 to index
      %c5_138 = arith.constant 5 : index
      %c0_139 = arith.constant 0 : index
      %380 = vector.load %arg6[%379, %c5_138, %c0_139] : memref<14x16x32xf32, #tpu.memory_space<vmem>>, vector<8x8x32xf32>
      %381 = vector.extract_strided_slice %6 {offsets = [5, 5, 0], sizes = [1, 1, 32], strides = [1, 1, 1]} : vector<7x7x32xf32> to vector<1x1x32xf32>
      %382 = vector.shape_cast %381 : vector<1x1x32xf32> to vector<32xf32>
      %383 = vector.shape_cast %382 : vector<32xf32> to vector<1x1x32xf32>
      %384 = vector.broadcast %383 : vector<1x1x32xf32> to vector<8x8x32xf32>
      %385 = arith.mulf %380, %384 : vector<8x8x32xf32>
      %386 = arith.addf %377, %385 : vector<8x8x32xf32>
      %c5_i32_140 = arith.constant 5 : i32
      %387 = arith.addi %15, %c5_i32_140 : i32
      %388 = arith.index_cast %387 : i32 to index
      %c6_141 = arith.constant 6 : index
      %c0_142 = arith.constant 0 : index
      %389 = vector.load %arg6[%388, %c6_141, %c0_142] : memref<14x16x32xf32, #tpu.memory_space<vmem>>, vector<8x8x32xf32>
      %390 = vector.extract_strided_slice %6 {offsets = [5, 6, 0], sizes = [1, 1, 32], strides = [1, 1, 1]} : vector<7x7x32xf32> to vector<1x1x32xf32>
      %391 = vector.shape_cast %390 : vector<1x1x32xf32> to vector<32xf32>
      %392 = vector.shape_cast %391 : vector<32xf32> to vector<1x1x32xf32>
      %393 = vector.broadcast %392 : vector<1x1x32xf32> to vector<8x8x32xf32>
      %394 = arith.mulf %389, %393 : vector<8x8x32xf32>
      %395 = arith.addf %386, %394 : vector<8x8x32xf32>
      %c6_i32 = arith.constant 6 : i32
      %396 = arith.addi %15, %c6_i32 : i32
      %397 = arith.index_cast %396 : i32 to index
      %c0_143 = arith.constant 0 : index
      %c0_144 = arith.constant 0 : index
      %398 = vector.load %arg6[%397, %c0_143, %c0_144] : memref<14x16x32xf32, #tpu.memory_space<vmem>>, vector<8x8x32xf32>
      %399 = vector.extract_strided_slice %6 {offsets = [6, 0, 0], sizes = [1, 1, 32], strides = [1, 1, 1]} : vector<7x7x32xf32> to vector<1x1x32xf32>
      %400 = vector.shape_cast %399 : vector<1x1x32xf32> to vector<32xf32>
      %401 = vector.shape_cast %400 : vector<32xf32> to vector<1x1x32xf32>
      %402 = vector.broadcast %401 : vector<1x1x32xf32> to vector<8x8x32xf32>
      %403 = arith.mulf %398, %402 : vector<8x8x32xf32>
      %404 = arith.addf %395, %403 : vector<8x8x32xf32>
      %c6_i32_145 = arith.constant 6 : i32
      %405 = arith.addi %15, %c6_i32_145 : i32
      %406 = arith.index_cast %405 : i32 to index
      %c1_146 = arith.constant 1 : index
      %c0_147 = arith.constant 0 : index
      %407 = vector.load %arg6[%406, %c1_146, %c0_147] : memref<14x16x32xf32, #tpu.memory_space<vmem>>, vector<8x8x32xf32>
      %408 = vector.extract_strided_slice %6 {offsets = [6, 1, 0], sizes = [1, 1, 32], strides = [1, 1, 1]} : vector<7x7x32xf32> to vector<1x1x32xf32>
      %409 = vector.shape_cast %408 : vector<1x1x32xf32> to vector<32xf32>
      %410 = vector.shape_cast %409 : vector<32xf32> to vector<1x1x32xf32>
      %411 = vector.broadcast %410 : vector<1x1x32xf32> to vector<8x8x32xf32>
      %412 = arith.mulf %407, %411 : vector<8x8x32xf32>
      %413 = arith.addf %404, %412 : vector<8x8x32xf32>
      %c6_i32_148 = arith.constant 6 : i32
      %414 = arith.addi %15, %c6_i32_148 : i32
      %415 = arith.index_cast %414 : i32 to index
      %c2_149 = arith.constant 2 : index
      %c0_150 = arith.constant 0 : index
      %416 = vector.load %arg6[%415, %c2_149, %c0_150] : memref<14x16x32xf32, #tpu.memory_space<vmem>>, vector<8x8x32xf32>
      %417 = vector.extract_strided_slice %6 {offsets = [6, 2, 0], sizes = [1, 1, 32], strides = [1, 1, 1]} : vector<7x7x32xf32> to vector<1x1x32xf32>
      %418 = vector.shape_cast %417 : vector<1x1x32xf32> to vector<32xf32>
      %419 = vector.shape_cast %418 : vector<32xf32> to vector<1x1x32xf32>
      %420 = vector.broadcast %419 : vector<1x1x32xf32> to vector<8x8x32xf32>
      %421 = arith.mulf %416, %420 : vector<8x8x32xf32>
      %422 = arith.addf %413, %421 : vector<8x8x32xf32>
      %c6_i32_151 = arith.constant 6 : i32
      %423 = arith.addi %15, %c6_i32_151 : i32
      %424 = arith.index_cast %423 : i32 to index
      %c3_152 = arith.constant 3 : index
      %c0_153 = arith.constant 0 : index
      %425 = vector.load %arg6[%424, %c3_152, %c0_153] : memref<14x16x32xf32, #tpu.memory_space<vmem>>, vector<8x8x32xf32>
      %426 = vector.extract_strided_slice %6 {offsets = [6, 3, 0], sizes = [1, 1, 32], strides = [1, 1, 1]} : vector<7x7x32xf32> to vector<1x1x32xf32>
      %427 = vector.shape_cast %426 : vector<1x1x32xf32> to vector<32xf32>
      %428 = vector.shape_cast %427 : vector<32xf32> to vector<1x1x32xf32>
      %429 = vector.broadcast %428 : vector<1x1x32xf32> to vector<8x8x32xf32>
      %430 = arith.mulf %425, %429 : vector<8x8x32xf32>
      %431 = arith.addf %422, %430 : vector<8x8x32xf32>
      %c6_i32_154 = arith.constant 6 : i32
      %432 = arith.addi %15, %c6_i32_154 : i32
      %433 = arith.index_cast %432 : i32 to index
      %c4_155 = arith.constant 4 : index
      %c0_156 = arith.constant 0 : index
      %434 = vector.load %arg6[%433, %c4_155, %c0_156] : memref<14x16x32xf32, #tpu.memory_space<vmem>>, vector<8x8x32xf32>
      %435 = vector.extract_strided_slice %6 {offsets = [6, 4, 0], sizes = [1, 1, 32], strides = [1, 1, 1]} : vector<7x7x32xf32> to vector<1x1x32xf32>
      %436 = vector.shape_cast %435 : vector<1x1x32xf32> to vector<32xf32>
      %437 = vector.shape_cast %436 : vector<32xf32> to vector<1x1x32xf32>
      %438 = vector.broadcast %437 : vector<1x1x32xf32> to vector<8x8x32xf32>
      %439 = arith.mulf %434, %438 : vector<8x8x32xf32>
      %440 = arith.addf %431, %439 : vector<8x8x32xf32>
      %c6_i32_157 = arith.constant 6 : i32
      %441 = arith.addi %15, %c6_i32_157 : i32
      %442 = arith.index_cast %441 : i32 to index
      %c5_158 = arith.constant 5 : index
      %c0_159 = arith.constant 0 : index
      %443 = vector.load %arg6[%442, %c5_158, %c0_159] : memref<14x16x32xf32, #tpu.memory_space<vmem>>, vector<8x8x32xf32>
      %444 = vector.extract_strided_slice %6 {offsets = [6, 5, 0], sizes = [1, 1, 32], strides = [1, 1, 1]} : vector<7x7x32xf32> to vector<1x1x32xf32>
      %445 = vector.shape_cast %444 : vector<1x1x32xf32> to vector<32xf32>
      %446 = vector.shape_cast %445 : vector<32xf32> to vector<1x1x32xf32>
      %447 = vector.broadcast %446 : vector<1x1x32xf32> to vector<8x8x32xf32>
      %448 = arith.mulf %443, %447 : vector<8x8x32xf32>
      %449 = arith.addf %440, %448 : vector<8x8x32xf32>
      %c6_i32_160 = arith.constant 6 : i32
      %450 = arith.addi %15, %c6_i32_160 : i32
      %451 = arith.index_cast %450 : i32 to index
      %c6_161 = arith.constant 6 : index
      %c0_162 = arith.constant 0 : index
      %452 = vector.load %arg6[%451, %c6_161, %c0_162] : memref<14x16x32xf32, #tpu.memory_space<vmem>>, vector<8x8x32xf32>
      %453 = vector.extract_strided_slice %6 {offsets = [6, 6, 0], sizes = [1, 1, 32], strides = [1, 1, 1]} : vector<7x7x32xf32> to vector<1x1x32xf32>
      %454 = vector.shape_cast %453 : vector<1x1x32xf32> to vector<32xf32>
      %455 = vector.shape_cast %454 : vector<32xf32> to vector<1x1x32xf32>
      %456 = vector.broadcast %455 : vector<1x1x32xf32> to vector<8x8x32xf32>
      %457 = arith.mulf %452, %456 : vector<8x8x32xf32>
      %458 = arith.addf %449, %457 : vector<8x8x32xf32>
      %459 = arith.index_cast %arg7 : i32 to index
      %460 = arith.index_cast %15 : i32 to index
      %c0_163 = arith.constant 0 : index
      %c0_164 = arith.constant 0 : index
      %461 = vector.load %arg5[%459, %460, %c0_163, %c0_164] : memref<2x8x8x32xf32, #tpu.memory_space<vmem>>, vector<1x8x8x32xf32>
      %462 = vector.shape_cast %461 : vector<1x8x8x32xf32> to vector<8x8x32xf32>
      %463 = vector.shape_cast %458 : vector<8x8x32xf32> to vector<1x8x8x32xf32>
      tpu.vector_store %arg5[%459, %460, %c0_163, %c0_164], %463 {strides = array<i32>} : memref<2x8x8x32xf32, #tpu.memory_space<vmem>>, vector<1x8x8x32xf32>,
      %c1_i32_165 = arith.constant 1 : i32
    }
    %c2_i32_16 = arith.constant 2 : i32
    return
  }
  func.func @transform_0(%arg0: i32, %arg1: i32) -> (i32, i32, i32, i32) {
    %c0_i32 = arith.constant 0 : i32
    %c0_i32_0 = arith.constant 0 : i32
    %c0_i32_1 = arith.constant 0 : i32
    return %arg0, %c0_i32, %c0_i32_0, %arg1 : i32, i32, i32, i32
  }
  func.func @transform_1(%arg0: i32, %arg1: i32) -> (i32, i32, i32) {
    %c0_i32 = arith.constant 0 : i32
    %c0_i32_0 = arith.constant 0 : i32
    %c0_i32_1 = arith.constant 0 : i32
    return %c0_i32, %c0_i32_0, %arg1 : i32, i32, i32
  }
  func.func @transform_2(%arg0: i32, %arg1: i32) -> (i32, i32, i32) {
    %c0_i32 = arith.constant 0 : i32
    %c0_i32_0 = arith.constant 0 : i32
    %c0_i32_1 = arith.constant 0 : i32
    return %c0_i32, %c0_i32_0, %arg1 : i32, i32, i32
  }
  func.func @transform_3(%arg0: i32, %arg1: i32) -> (i32, i32, i32, i32) {
    %c0_i32 = arith.constant 0 : i32
    %c0_i32_0 = arith.constant 0 : i32
    %c0_i32_1 = arith.constant 0 : i32
    return %arg0, %c0_i32, %c0_i32_0, %arg1 : i32, i32, i32, i32
  }
}

</mosaic_0001>

<llo_original>
// kernel: tpu_custom_call.1
$region0: #{tpu_custom_call.1}
  #allocation0 [shape = 'u32[]', space=smem, size = 0x4, offset = 0x4, fixed_abs, tag = 'smem constant byte address 0x4 - core index']
  #allocation1 [shape = 'u32[144,128]{1,0:T(1,128)}', space=vmem, size = 0x12000, scoped, tag = 'internal scratch']
  #allocation2 [shape = 'f32[14,16,32]{2,1,0:T(8,128)}', space=vmem, size = 0x1c000, scoped, tag = 'scratch operand']
  %s0 = inlined_call_operand.hbm [shape: f32[2,8,8,32], index: 0, kind: input, shape index: {}]
  %s1 = inlined_call_operand.hbm [shape: f32[7,7,32], index: 1, kind: input, shape index: {}]
  %s2 = inlined_call_operand.vmem [shape: f32[1,1,32], index: 2, kind: input, shape index: {}]
  %s3 = inlined_call_operand.hbm [shape: f32[2,8,8,32], index: 3, kind: output, shape index: {}]
  %s4 = sld [smem:[#allocation0]]
  $region37: #{tpu_custom_call.1} parent=0
    _
  %s6 = ssub.s32 1, %s4
  %s7 = scalar_select 0, %s6, %s4
  $region1: #{tpu_custom_call.1} parent=0
    #allocation3 [shape = 'u8[65536]{0}', space=vmem, size = 0x10000, scoped, tag = 'input window, operand 0, single buffered']
    #allocation4 [shape = 's32[1]{0}', space=sflag, size = 0x4, scoped, tag = 'scoped memory for tpu_custom_call.1']
    #allocation5 [shape = 's32[1]{0}', space=sflag, size = 0x4, scoped, tag = 'scoped memory for tpu_custom_call.1']
    #allocation6 [shape = 'u8[28672]{0}', space=vmem, size = 0x7000, scoped, tag = 'input window, operand 1, single buffered']
    #allocation7 [shape = 's32[1]{0}', space=sflag, size = 0x4, scoped, tag = 'scoped memory for tpu_custom_call.1']
    #allocation8 [shape = 'u8[65536]{0}', space=vmem, size = 0x10000, scoped, tag = 'output window, operand 0, single buffered']
    %8 = vsyncpa [#allocation4], 0
    %9 = vsyncpa [#allocation7], 0
    %10 = vsyncpa [#allocation5], 0
    // Predicated region
    $region2: #{tpu_custom_call.1} parent=1 // pred_check
      _
    $region3: #{tpu_custom_call.1} parent=1 // pred_check_branch
      %12 = sbr.rel (0) target = $region5
    $region4: #{tpu_custom_call.1} parent=1 // pred_region
      %s14 = ssub.s32 2048, 2048
      %15 = vsyncadd [#allocation4], %s14
      %s16 = sshll.u32 [#allocation3], 4
      %s17 = int_to_ptr.vmem [resolvable:$true] %s16
      %22 = dma.hbm_to_vmem [thread:$0]  %s0, 2048, %s17, [#allocation4], 128, 128, 8
    $region5: #{tpu_custom_call.1} parent=1 // pred_fallthru
      _
    // Predicated region
    $region6: #{tpu_custom_call.1} parent=1 // pred_check
      _
    $region7: #{tpu_custom_call.1} parent=1 // pred_check_branch
      %24 = sbr.rel (0) target = $region9
    $region8: #{tpu_custom_call.1} parent=1 // pred_region
      %s26 = ssub.s32 896, 896
      %27 = vsyncadd [#allocation7], %s26
      %s28 = sshll.u32 [#allocation6], 4
      %s29 = int_to_ptr.vmem [resolvable:$true] %s28
      %34 = dma.hbm_to_vmem [thread:$0]  %s1, 896, %s29, [#allocation7], 128, 128, 8
    $region9: #{tpu_custom_call.1} parent=1 // pred_fallthru
      _
    // Predicated region
    $region10: #{tpu_custom_call.1} parent=1 // pred_check
      _
    $region11: #{tpu_custom_call.1} parent=1 // pred_check_branch
      %36 = sbr.rel (0) target = $region13
    $region12: #{tpu_custom_call.1} parent=1 // pred_region
      _
    $region13: #{tpu_custom_call.1} parent=1 // pred_fallthru
      _
    // Predicated region
    $region14: #{tpu_custom_call.1} parent=1 // pred_check
      _
    $region15: #{tpu_custom_call.1} parent=1 // pred_check_branch
      %38 = sbr.rel (0) target = $region17
    $region16: #{tpu_custom_call.1} parent=1 // pred_region
      %39 = dma.done [#allocation4], 2048
    $region17: #{tpu_custom_call.1} parent=1 // pred_fallthru
      _
    // Predicated region
    $region18: #{tpu_custom_call.1} parent=1 // pred_check
      _
    $region19: #{tpu_custom_call.1} parent=1 // pred_check_branch
      %41 = sbr.rel (0) target = $region21
    $region20: #{tpu_custom_call.1} parent=1 // pred_region
      %42 = dma.done [#allocation7], 896
    $region21: #{tpu_custom_call.1} parent=1 // pred_fallthru
      _
    %vm43 = vcmask 261120
    %44 = vst.msk [vmem:[#allocation2] sm:$0xff] %vm43, 0.0
    %45 = vst.msk [vmem:[#allocation2 + $0x8] sm:$0xff] %vm43, 0.0
    %46 = vst.msk [vmem:[#allocation2 + $0x10] sm:$0xff] %vm43, 0.0
    %47 = vst.msk [vmem:[#allocation2 + $0x18] sm:$0xff] %vm43, 0.0
    %48 = vst.msk [vmem:[#allocation2 + $0x20] sm:$0xff] %vm43, 0.0
    %49 = vst.msk [vmem:[#allocation2 + $0x28] sm:$0xff] %vm43, 0.0
    %s50 = scalar_lea.vmem [#allocation2], 176
    %51 = vst.msk [vmem:[%s50] sm:$0xff] %vm43, 0.0
    %52 = vst.msk [vmem:[%s50 + $0x8] sm:$0xff] %vm43, 0.0
    %53 = vst.msk [vmem:[%s50 + $0x10] sm:$0xff] %vm43, 0.0
    %54 = vst.msk [vmem:[%s50 + $0x18] sm:$0xff] %vm43, 0.0
    %55 = vst.msk [vmem:[%s50 + $0x20] sm:$0xff] %vm43, 0.0
    %56 = vst.msk [vmem:[%s50 + $0x28] sm:$0xff] %vm43, 0.0
    %s57 = scalar_lea.vmem [#allocation2], 48
    %vm58 = vcmask 256000
    %59 = vst.msk [vmem:[%s57] sm:$0x7] %vm58, 0.0
    %60 = vst.msk [vmem:[%s57 + $0x10] sm:$0x7] %vm58, 0.0
    %61 = vst.msk [vmem:[%s57 + $0x20] sm:$0x7] %vm58, 0.0
    %62 = vst.msk [vmem:[%s57 + $0x30] sm:$0x7] %vm58, 0.0
    %63 = vst.msk [vmem:[%s57 + $0x40] sm:$0x7] %vm58, 0.0
    %64 = vst.msk [vmem:[%s57 + $0x50] sm:$0x7] %vm58, 0.0
    %65 = vst.msk [vmem:[%s57 + $0x60] sm:$0x7] %vm58, 0.0
    %66 = vst.msk [vmem:[%s57 + $0x70] sm:$0x7] %vm58, 0.0
    %67 = vst.msk [vmem:[%s57 + $0xb] sm:$0x7] %vm58, 0.0
    %68 = vst.msk [vmem:[%s57 + $0x1b] sm:$0x7] %vm58, 0.0
    %69 = vst.msk [vmem:[%s57 + $0x2b] sm:$0x7] %vm58, 0.0
    %70 = vst.msk [vmem:[%s57 + $0x3b] sm:$0x7] %vm58, 0.0
    %71 = vst.msk [vmem:[%s57 + $0x4b] sm:$0x7] %vm58, 0.0
    %72 = vst.msk [vmem:[%s57 + $0x5b] sm:$0x7] %vm58, 0.0
    %73 = vst.msk [vmem:[%s57 + $0x6b] sm:$0x7] %vm58, 0.0
    %74 = vst.msk [vmem:[%s57 + $0x7b] sm:$0x7] %vm58, 0.0
    %v75 = vld [vmem:[#allocation6] sm:$0x7f]
    %v76 = vld [vmem:[#allocation6 + $0x8] sm:$0x7f]
    %v77 = vld [vmem:[#allocation6 + $0x10] sm:$0x7f]
    %v78 = vld [vmem:[#allocation6 + $0x18] sm:$0x7f]
    %v79 = vld [vmem:[#allocation6 + $0x20] sm:$0x7f]
    %v80 = vld [vmem:[#allocation6 + $0x28] sm:$0x7f]
    %v81 = vld [vmem:[#allocation6 + $0x30] sm:$0x7f]
    %v82 = vld [vmem:[%s2] sm:$0x1]
    loop: start=0, step=1, limit=2
    $region22: #{tpu_custom_call.1} parent=1 // loop_pre_header
      _
    $region23: #{tpu_custom_call.1} parent=1 // loop_header
      %s84 = sphi 0, %s88
      %p85 = scmp.ge.s32.totalorder %s84, 2
    $region24: #{tpu_custom_call.1} parent=1 // loop_header_branch
      %87 = sbr.rel (%p85) target = $region28
    $region25: #{tpu_custom_call.1} parent=1 // loop_body
      %s89 = smul.u32 %s84, 64
      %s90 = scalar_lea.vmem [#allocation3], %s89
      %v91 = vld [vmem:[%s90] sm:$0xff]
      %v92 = vld [vmem:[%s90 + $0x8] sm:$0xff]
      %v93 = vld [vmem:[%s90 + $0x10] sm:$0xff]
      %v94 = vld [vmem:[%s90 + $0x18] sm:$0xff]
      %v95 = vld [vmem:[%s90 + $0x20] sm:$0xff]
      %v96 = vld [vmem:[%s90 + $0x28] sm:$0xff]
      %v97 = vld [vmem:[%s90 + $0x30] sm:$0xff]
      %v98 = vld [vmem:[%s90 + $0x38] sm:$0xff]
      %99 = vst.msk [vmem:[%s57 + $0x3] sm:$0xff] %vm43, %v91
      %100 = vst.msk [vmem:[%s57 + $0x13] sm:$0xff] %vm43, %v92
      %101 = vst.msk [vmem:[%s57 + $0x23] sm:$0xff] %vm43, %v93
      %102 = vst.msk [vmem:[%s57 + $0x33] sm:$0xff] %vm43, %v94
      %103 = vst.msk [vmem:[%s57 + $0x43] sm:$0xff] %vm43, %v95
      %104 = vst.msk [vmem:[%s57 + $0x53] sm:$0xff] %vm43, %v96
      %105 = vst.msk [vmem:[%s57 + $0x63] sm:$0xff] %vm43, %v97
      %106 = vst.msk [vmem:[%s57 + $0x73] sm:$0xff] %vm43, %v98
      %v108 = vlaneseq
      %v109 = vshrl.u32 %v108, 7
      %v110 = vsub.s32 0, %v109
      %v111 = vrot.slane %v82, %v110
      %v113 = vld [vmem:[#allocation2] sm:$0xff]
      %v114 = vld [vmem:[#allocation2 + $0x10] sm:$0xff]
      %v115 = vld [vmem:[#allocation2 + $0x20] sm:$0xff]
      %v116 = vld [vmem:[#allocation2 + $0x30] sm:$0xff]
      %v117 = vld [vmem:[#allocation2 + $0x40] sm:$0xff]
      %v118 = vld [vmem:[#allocation2 + $0x50] sm:$0xff]
      %v119 = vld [vmem:[#allocation2 + $0x60] sm:$0xff]
      %v120 = vld [vmem:[#allocation2 + $0x70] sm:$0xff]
      %v121 = vlaneseq
      %v122 = vshrl.u32 %v121, 7
      %v123 = vsub.s32 0, %v122
      %v124 = vrot.slane %v75, %v123
      %v125 = vmul.f32 %v113, %v124
      %v126 = vmul.f32 %v114, %v124
      %v127 = vmul.f32 %v115, %v124
      %v128 = vmul.f32 %v116, %v124
      %v129 = vmul.f32 %v117, %v124
      %v130 = vmul.f32 %v118, %v124
      %v131 = vmul.f32 %v119, %v124
      %v132 = vmul.f32 %v120, %v124
      %v133 = vadd.f32 %v111, %v125
      %v134 = vadd.f32 %v111, %v126
      %v135 = vadd.f32 %v111, %v127
      %v136 = vadd.f32 %v111, %v128
      %v137 = vadd.f32 %v111, %v129
      %v138 = vadd.f32 %v111, %v130
      %v139 = vadd.f32 %v111, %v131
      %v140 = vadd.f32 %v111, %v132
      %v141 = vld [vmem:[#allocation2 + $0x1] sm:$0xff]
      %v142 = vld [vmem:[#allocation2 + $0x11] sm:$0xff]
      %v143 = vld [vmem:[#allocation2 + $0x21] sm:$0xff]
      %v144 = vld [vmem:[#allocation2 + $0x31] sm:$0xff]
      %v145 = vld [vmem:[#allocation2 + $0x41] sm:$0xff]
      %v146 = vld [vmem:[#allocation2 + $0x51] sm:$0xff]
      %v147 = vld [vmem:[#allocation2 + $0x61] sm:$0xff]
      %v148 = vld [vmem:[#allocation2 + $0x71] sm:$0xff]
      %v149 = vlaneseq
      %v150 = vshrl.u32 %v149, 7
      %v151 = vsub.s32 1, %v150
      %v152 = vrot.slane %v75, %v151
      %v153 = vmul.f32 %v141, %v152
      %v154 = vmul.f32 %v142, %v152
      %v155 = vmul.f32 %v143, %v152
      %v156 = vmul.f32 %v144, %v152
      %v157 = vmul.f32 %v145, %v152
      %v158 = vmul.f32 %v146, %v152
      %v159 = vmul.f32 %v147, %v152
      %v160 = vmul.f32 %v148, %v152
      %v161 = vadd.f32 %v133, %v153
      %v162 = vadd.f32 %v134, %v154
      %v163 = vadd.f32 %v135, %v155
      %v164 = vadd.f32 %v136, %v156
      %v165 = vadd.f32 %v137, %v157
      %v166 = vadd.f32 %v138, %v158
      %v167 = vadd.f32 %v139, %v159
      %v168 = vadd.f32 %v140, %v160
      %v169 = vld [vmem:[#allocation2 + $0x2] sm:$0xff]
      %v170 = vld [vmem:[#allocation2 + $0x12] sm:$0xff]
      %v171 = vld [vmem:[#allocation2 + $0x22] sm:$0xff]
      %v172 = vld [vmem:[#allocation2 + $0x32] sm:$0xff]
      %v173 = vld [vmem:[#allocation2 + $0x42] sm:$0xff]
      %v174 = vld [vmem:[#allocation2 + $0x52] sm:$0xff]
      %v175 = vld [vmem:[#allocation2 + $0x62] sm:$0xff]
      %v176 = vld [vmem:[#allocation2 + $0x72] sm:$0xff]
      %v177 = vlaneseq
      %v178 = vshrl.u32 %v177, 7
      %v179 = vsub.s32 2, %v178
      %v180 = vrot.slane %v75, %v179
      %v181 = vmul.f32 %v169, %v180
      %v182 = vmul.f32 %v170, %v180
      %v183 = vmul.f32 %v171, %v180
      %v184 = vmul.f32 %v172, %v180
      %v185 = vmul.f32 %v173, %v180
      %v186 = vmul.f32 %v174, %v180
      %v187 = vmul.f32 %v175, %v180
      %v188 = vmul.f32 %v176, %v180
      %v189 = vadd.f32 %v161, %v181
      %v190 = vadd.f32 %v162, %v182
      %v191 = vadd.f32 %v163, %v183
      %v192 = vadd.f32 %v164, %v184
      %v193 = vadd.f32 %v165, %v185
      %v194 = vadd.f32 %v166, %v186
      %v195 = vadd.f32 %v167, %v187
      %v196 = vadd.f32 %v168, %v188
      %v197 = vld [vmem:[#allocation2 + $0x3] sm:$0xff]
      %v198 = vld [vmem:[#allocation2 + $0x13] sm:$0xff]
      %v199 = vld [vmem:[#allocation2 + $0x23] sm:$0xff]
      %v200 = vld [vmem:[#allocation2 + $0x33] sm:$0xff]
      %v201 = vld [vmem:[#allocation2 + $0x43] sm:$0xff]
      %v202 = vld [vmem:[#allocation2 + $0x53] sm:$0xff]
      %v203 = vld [vmem:[#allocation2 + $0x63] sm:$0xff]
      %v204 = vld [vmem:[#allocation2 + $0x73] sm:$0xff]
      %v205 = vlaneseq
      %v206 = vshrl.u32 %v205, 7
      %v207 = vsub.s32 3, %v206
      %v208 = vrot.slane %v75, %v207
      %v209 = vmul.f32 %v197, %v208
      %v210 = vmul.f32 %v198, %v208
      %v211 = vmul.f32 %v199, %v208
      %v212 = vmul.f32 %v200, %v208
      %v213 = vmul.f32 %v201, %v208
      %v214 = vmul.f32 %v202, %v208
      %v215 = vmul.f32 %v203, %v208
      %v216 = vmul.f32 %v204, %v208
      %v217 = vadd.f32 %v189, %v209
      %v218 = vadd.f32 %v190, %v210
      %v219 = vadd.f32 %v191, %v211
      %v220 = vadd.f32 %v192, %v212
      %v221 = vadd.f32 %v193, %v213
      %v222 = vadd.f32 %v194, %v214
      %v223 = vadd.f32 %v195, %v215
      %v224 = vadd.f32 %v196, %v216
      %v225 = vld [vmem:[#allocation2 + $0x4] sm:$0xff]
      %v226 = vld [vmem:[#allocation2 + $0x14] sm:$0xff]
      %v227 = vld [vmem:[#allocation2 + $0x24] sm:$0xff]
      %v228 = vld [vmem:[#allocation2 + $0x34] sm:$0xff]
      %v229 = vld [vmem:[#allocation2 + $0x44] sm:$0xff]
      %v230 = vld [vmem:[#allocation2 + $0x54] sm:$0xff]
      %v231 = vld [vmem:[#allocation2 + $0x64] sm:$0xff]
      %v232 = vld [vmem:[#allocation2 + $0x74] sm:$0xff]
      %v233 = vlaneseq
      %v234 = vshrl.u32 %v233, 7
      %v235 = vsub.s32 4, %v234
      %v236 = vrot.slane %v75, %v235
      %v237 = vmul.f32 %v225, %v236
      %v238 = vmul.f32 %v226, %v236
      %v239 = vmul.f32 %v227, %v236
      %v240 = vmul.f32 %v228, %v236
      %v241 = vmul.f32 %v229, %v236
      %v242 = vmul.f32 %v230, %v236
      %v243 = vmul.f32 %v231, %v236
      %v244 = vmul.f32 %v232, %v236
      %v245 = vadd.f32 %v217, %v237
      %v246 = vadd.f32 %v218, %v238
      %v247 = vadd.f32 %v219, %v239
      %v248 = vadd.f32 %v220, %v240
      %v249 = vadd.f32 %v221, %v241
      %v250 = vadd.f32 %v222, %v242
      %v251 = vadd.f32 %v223, %v243
      %v252 = vadd.f32 %v224, %v244
      %v253 = vld [vmem:[#allocation2 + $0x5] sm:$0xff]
      %v254 = vld [vmem:[#allocation2 + $0x15] sm:$0xff]
      %v255 = vld [vmem:[#allocation2 + $0x25] sm:$0xff]
      %v256 = vld [vmem:[#allocation2 + $0x35] sm:$0xff]
      %v257 = vld [vmem:[#allocation2 + $0x45] sm:$0xff]
      %v258 = vld [vmem:[#allocation2 + $0x55] sm:$0xff]
      %v259 = vld [vmem:[#allocation2 + $0x65] sm:$0xff]
      %v260 = vld [vmem:[#allocation2 + $0x75] sm:$0xff]
      %v261 = vlaneseq
      %v262 = vshrl.u32 %v261, 7
      %v263 = vsub.s32 5, %v262
      %v264 = vrot.slane %v75, %v263
      %v265 = vmul.f32 %v253, %v264
      %v266 = vmul.f32 %v254, %v264
      %v267 = vmul.f32 %v255, %v264
      %v268 = vmul.f32 %v256, %v264
      %v269 = vmul.f32 %v257, %v264
      %v270 = vmul.f32 %v258, %v264
      %v271 = vmul.f32 %v259, %v264
      %v272 = vmul.f32 %v260, %v264
      %v273 = vadd.f32 %v245, %v265
      %v274 = vadd.f32 %v246, %v266
      %v275 = vadd.f32 %v247, %v267
      %v276 = vadd.f32 %v248, %v268
      %v277 = vadd.f32 %v249, %v269
      %v278 = vadd.f32 %v250, %v270
      %v279 = vadd.f32 %v251, %v271
      %v280 = vadd.f32 %v252, %v272
      %v281 = vld [vmem:[#allocation2 + $0x6] sm:$0xff]
      %v282 = vld [vmem:[#allocation2 + $0x16] sm:$0xff]
      %v283 = vld [vmem:[#allocation2 + $0x26] sm:$0xff]
      %v284 = vld [vmem:[#allocation2 + $0x36] sm:$0xff]
      %v285 = vld [vmem:[#allocation2 + $0x46] sm:$0xff]
      %v286 = vld [vmem:[#allocation2 + $0x56] sm:$0xff]
      %v287 = vld [vmem:[#allocation2 + $0x66] sm:$0xff]
      %v288 = vld [vmem:[#allocation2 + $0x76] sm:$0xff]
      %v289 = vlaneseq
      %v290 = vshrl.u32 %v289, 7
      %v291 = vsub.s32 6, %v290
      %v292 = vrot.slane %v75, %v291
      %v293 = vmul.f32 %v281, %v292
      %v294 = vmul.f32 %v282, %v292
      %v295 = vmul.f32 %v283, %v292
      %v296 = vmul.f32 %v284, %v292
      %v297 = vmul.f32 %v285, %v292
      %v298 = vmul.f32 %v286, %v292
      %v299 = vmul.f32 %v287, %v292
      %v300 = vmul.f32 %v288, %v292
      %v301 = vadd.f32 %v273, %v293
      %v302 = vadd.f32 %v274, %v294
      %v303 = vadd.f32 %v275, %v295
      %v304 = vadd.f32 %v276, %v296
      %v305 = vadd.f32 %v277, %v297
      %v306 = vadd.f32 %v278, %v298
      %v307 = vadd.f32 %v279, %v299
      %v308 = vadd.f32 %v280, %v300
      %s309 = scalar_lea.vmem [#allocation2], 16
      %v310 = vld [vmem:[%s309] sm:$0xff]
      %v311 = vld [vmem:[%s309 + $0x10] sm:$0xff]
      %v312 = vld [vmem:[%s309 + $0x20] sm:$0xff]
      %v313 = vld [vmem:[%s309 + $0x30] sm:$0xff]
      %v314 = vld [vmem:[%s309 + $0x40] sm:$0xff]
      %v315 = vld [vmem:[%s309 + $0x50] sm:$0xff]
      %v316 = vld [vmem:[%s309 + $0x60] sm:$0xff]
      %v317 = vld [vmem:[%s309 + $0x70] sm:$0xff]
      %v318 = vlaneseq
      %v319 = vshrl.u32 %v318, 7
      %v320 = vsub.s32 0, %v319
      %v321 = vrot.slane %v76, %v320
      %v322 = vmul.f32 %v310, %v321
      %v323 = vmul.f32 %v311, %v321
      %v324 = vmul.f32 %v312, %v321
      %v325 = vmul.f32 %v313, %v321
      %v326 = vmul.f32 %v314, %v321
      %v327 = vmul.f32 %v315, %v321
      %v328 = vmul.f32 %v316, %v321
      %v329 = vmul.f32 %v317, %v321
      %v330 = vadd.f32 %v301, %v322
      %v331 = vadd.f32 %v302, %v323
      %v332 = vadd.f32 %v303, %v324
      %v333 = vadd.f32 %v304, %v325
      %v334 = vadd.f32 %v305, %v326
      %v335 = vadd.f32 %v306, %v327
      %v336 = vadd.f32 %v307, %v328
      %v337 = vadd.f32 %v308, %v329
      %v338 = vld [vmem:[%s309 + $0x1] sm:$0xff]
      %v339 = vld [vmem:[%s309 + $0x11] sm:$0xff]
      %v340 = vld [vmem:[%s309 + $0x21] sm:$0xff]
      %v341 = vld [vmem:[%s309 + $0x31] sm:$0xff]
      %v342 = vld [vmem:[%s309 + $0x41] sm:$0xff]
      %v343 = vld [vmem:[%s309 + $0x51] sm:$0xff]
      %v344 = vld [vmem:[%s309 + $0x61] sm:$0xff]
      %v345 = vld [vmem:[%s309 + $0x71] sm:$0xff]
      %v346 = vlaneseq
      %v347 = vshrl.u32 %v346, 7
      %v348 = vsub.s32 1, %v347
      %v349 = vrot.slane %v76, %v348
      %v350 = vmul.f32 %v338, %v349
      %v351 = vmul.f32 %v339, %v349
      %v352 = vmul.f32 %v340, %v349
      %v353 = vmul.f32 %v341, %v349
      %v354 = vmul.f32 %v342, %v349
      %v355 = vmul.f32 %v343, %v349
      %v356 = vmul.f32 %v344, %v349
      %v357 = vmul.f32 %v345, %v349
      %v358 = vadd.f32 %v330, %v350
      %v359 = vadd.f32 %v331, %v351
      %v360 = vadd.f32 %v332, %v352
      %v361 = vadd.f32 %v333, %v353
      %v362 = vadd.f32 %v334, %v354
      %v363 = vadd.f32 %v335, %v355
      %v364 = vadd.f32 %v336, %v356
      %v365 = vadd.f32 %v337, %v357
      %v366 = vld [vmem:[%s309 + $0x2] sm:$0xff]
      %v367 = vld [vmem:[%s309 + $0x12] sm:$0xff]
      %v368 = vld [vmem:[%s309 + $0x22] sm:$0xff]
      %v369 = vld [vmem:[%s309 + $0x32] sm:$0xff]
      %v370 = vld [vmem:[%s309 + $0x42] sm:$0xff]
      %v371 = vld [vmem:[%s309 + $0x52] sm:$0xff]
      %v372 = vld [vmem:[%s309 + $0x62] sm:$0xff]
      %v373 = vld [vmem:[%s309 + $0x72] sm:$0xff]
      %v374 = vlaneseq
      %v375 = vshrl.u32 %v374, 7
      %v376 = vsub.s32 2, %v375
      %v377 = vrot.slane %v76, %v376
      %v378 = vmul.f32 %v366, %v377
      %v379 = vmul.f32 %v367, %v377
      %v380 = vmul.f32 %v368, %v377
      %v381 = vmul.f32 %v369, %v377
      %v382 = vmul.f32 %v370, %v377
      %v383 = vmul.f32 %v371, %v377
      %v384 = vmul.f32 %v372, %v377
      %v385 = vmul.f32 %v373, %v377
      %v386 = vadd.f32 %v358, %v378
      %v387 = vadd.f32 %v359, %v379
      %v388 = vadd.f32 %v360, %v380
      %v389 = vadd.f32 %v361, %v381
      %v390 = vadd.f32 %v362, %v382
      %v391 = vadd.f32 %v363, %v383
      %v392 = vadd.f32 %v364, %v384
      %v393 = vadd.f32 %v365, %v385
      %v394 = vld [vmem:[%s309 + $0x3] sm:$0xff]
      %v395 = vld [vmem:[%s309 + $0x13] sm:$0xff]
      %v396 = vld [vmem:[%s309 + $0x23] sm:$0xff]
      %v397 = vld [vmem:[%s309 + $0x33] sm:$0xff]
      %v398 = vld [vmem:[%s309 + $0x43] sm:$0xff]
      %v399 = vld [vmem:[%s309 + $0x53] sm:$0xff]
      %v400 = vld [vmem:[%s309 + $0x63] sm:$0xff]
      %v401 = vld [vmem:[%s309 + $0x73] sm:$0xff]
      %v402 = vlaneseq
      %v403 = vshrl.u32 %v402, 7
      %v404 = vsub.s32 3, %v403
      %v405 = vrot.slane %v76, %v404
      %v406 = vmul.f32 %v394, %v405
      %v407 = vmul.f32 %v395, %v405
      %v408 = vmul.f32 %v396, %v405
      %v409 = vmul.f32 %v397, %v405
      %v410 = vmul.f32 %v398, %v405
      %v411 = vmul.f32 %v399, %v405
      %v412 = vmul.f32 %v400, %v405
      %v413 = vmul.f32 %v401, %v405
      %v414 = vadd.f32 %v386, %v406
      %v415 = vadd.f32 %v387, %v407
      %v416 = vadd.f32 %v388, %v408
      %v417 = vadd.f32 %v389, %v409
      %v418 = vadd.f32 %v390, %v410
      %v419 = vadd.f32 %v391, %v411
      %v420 = vadd.f32 %v392, %v412
      %v421 = vadd.f32 %v393, %v413
      %v422 = vld [vmem:[%s309 + $0x4] sm:$0xff]
      %v423 = vld [vmem:[%s309 + $0x14] sm:$0xff]
      %v424 = vld [vmem:[%s309 + $0x24] sm:$0xff]
      %v425 = vld [vmem:[%s309 + $0x34] sm:$0xff]
      %v426 = vld [vmem:[%s309 + $0x44] sm:$0xff]
      %v427 = vld [vmem:[%s309 + $0x54] sm:$0xff]
      %v428 = vld [vmem:[%s309 + $0x64] sm:$0xff]
      %v429 = vld [vmem:[%s309 + $0x74] sm:$0xff]
      %v430 = vlaneseq
      %v431 = vshrl.u32 %v430, 7
      %v432 = vsub.s32 4, %v431
      %v433 = vrot.slane %v76, %v432
      %v434 = vmul.f32 %v422, %v433
      %v435 = vmul.f32 %v423, %v433
      %v436 = vmul.f32 %v424, %v433
      %v437 = vmul.f32 %v425, %v433
      %v438 = vmul.f32 %v426, %v433
      %v439 = vmul.f32 %v427, %v433
      %v440 = vmul.f32 %v428, %v433
      %v441 = vmul.f32 %v429, %v433
      %v442 = vadd.f32 %v414, %v434
      %v443 = vadd.f32 %v415, %v435
      %v444 = vadd.f32 %v416, %v436
      %v445 = vadd.f32 %v417, %v437
      %v446 = vadd.f32 %v418, %v438
      %v447 = vadd.f32 %v419, %v439
      %v448 = vadd.f32 %v420, %v440
      %v449 = vadd.f32 %v421, %v441
      %v450 = vld [vmem:[%s309 + $0x5] sm:$0xff]
      %v451 = vld [vmem:[%s309 + $0x15] sm:$0xff]
      %v452 = vld [vmem:[%s309 + $0x25] sm:$0xff]
      %v453 = vld [vmem:[%s309 + $0x35] sm:$0xff]
      %v454 = vld [vmem:[%s309 + $0x45] sm:$0xff]
      %v455 = vld [vmem:[%s309 + $0x55] sm:$0xff]
      %v456 = vld [vmem:[%s309 + $0x65] sm:$0xff]
      %v457 = vld [vmem:[%s309 + $0x75] sm:$0xff]
      %v458 = vlaneseq
      %v459 = vshrl.u32 %v458, 7
      %v460 = vsub.s32 5, %v459
      %v461 = vrot.slane %v76, %v460
      %v462 = vmul.f32 %v450, %v461
      %v463 = vmul.f32 %v451, %v461
      %v464 = vmul.f32 %v452, %v461
      %v465 = vmul.f32 %v453, %v461
      %v466 = vmul.f32 %v454, %v461
      %v467 = vmul.f32 %v455, %v461
      %v468 = vmul.f32 %v456, %v461
      %v469 = vmul.f32 %v457, %v461
      %v470 = vadd.f32 %v442, %v462
      %v471 = vadd.f32 %v443, %v463
      %v472 = vadd.f32 %v444, %v464
      %v473 = vadd.f32 %v445, %v465
      %v474 = vadd.f32 %v446, %v466
      %v475 = vadd.f32 %v447, %v467
      %v476 = vadd.f32 %v448, %v468
      %v477 = vadd.f32 %v449, %v469
      %v478 = vld [vmem:[%s309 + $0x6] sm:$0xff]
      %v479 = vld [vmem:[%s309 + $0x16] sm:$0xff]
      %v480 = vld [vmem:[%s309 + $0x26] sm:$0xff]
      %v481 = vld [vmem:[%s309 + $0x36] sm:$0xff]
      %v482 = vld [vmem:[%s309 + $0x46] sm:$0xff]
      %v483 = vld [vmem:[%s309 + $0x56] sm:$0xff]
      %v484 = vld [vmem:[%s309 + $0x66] sm:$0xff]
      %v485 = vld [vmem:[%s309 + $0x76] sm:$0xff]
      %v486 = vlaneseq
      %v487 = vshrl.u32 %v486, 7
      %v488 = vsub.s32 6, %v487
      %v489 = vrot.slane %v76, %v488
      %v490 = vmul.f32 %v478, %v489
      %v491 = vmul.f32 %v479, %v489
      %v492 = vmul.f32 %v480, %v489
      %v493 = vmul.f32 %v481, %v489
      %v494 = vmul.f32 %v482, %v489
      %v495 = vmul.f32 %v483, %v489
      %v496 = vmul.f32 %v484, %v489
      %v497 = vmul.f32 %v485, %v489
      %v498 = vadd.f32 %v470, %v490
      %v499 = vadd.f32 %v471, %v491
      %v500 = vadd.f32 %v472, %v492
      %v501 = vadd.f32 %v473, %v493
      %v502 = vadd.f32 %v474, %v494
      %v503 = vadd.f32 %v475, %v495
      %v504 = vadd.f32 %v476, %v496
      %v505 = vadd.f32 %v477, %v497
      %s506 = scalar_lea.vmem [#allocation2], 32
      %v507 = vld [vmem:[%s506] sm:$0xff]
      %v508 = vld [vmem:[%s506 + $0x10] sm:$0xff]
      %v509 = vld [vmem:[%s506 + $0x20] sm:$0xff]
      %v510 = vld [vmem:[%s506 + $0x30] sm:$0xff]
      %v511 = vld [vmem:[%s506 + $0x40] sm:$0xff]
      %v512 = vld [vmem:[%s506 + $0x50] sm:$0xff]
      %v513 = vld [vmem:[%s506 + $0x60] sm:$0xff]
      %v514 = vld [vmem:[%s506 + $0x70] sm:$0xff]
      %v515 = vlaneseq
      %v516 = vshrl.u32 %v515, 7
      %v517 = vsub.s32 0, %v516
      %v518 = vrot.slane %v77, %v517
      %v519 = vmul.f32 %v507, %v518
      %v520 = vmul.f32 %v508, %v518
      %v521 = vmul.f32 %v509, %v518
      %v522 = vmul.f32 %v510, %v518
      %v523 = vmul.f32 %v511, %v518
      %v524 = vmul.f32 %v512, %v518
      %v525 = vmul.f32 %v513, %v518
      %v526 = vmul.f32 %v514, %v518
      %v527 = vadd.f32 %v498, %v519
      %v528 = vadd.f32 %v499, %v520
      %v529 = vadd.f32 %v500, %v521
      %v530 = vadd.f32 %v501, %v522
      %v531 = vadd.f32 %v502, %v523
      %v532 = vadd.f32 %v503, %v524
      %v533 = vadd.f32 %v504, %v525
      %v534 = vadd.f32 %v505, %v526
      %v535 = vld [vmem:[%s506 + $0x1] sm:$0xff]
      %v536 = vld [vmem:[%s506 + $0x11] sm:$0xff]
      %v537 = vld [vmem:[%s506 + $0x21] sm:$0xff]
      %v538 = vld [vmem:[%s506 + $0x31] sm:$0xff]
      %v539 = vld [vmem:[%s506 + $0x41] sm:$0xff]
      %v540 = vld [vmem:[%s506 + $0x51] sm:$0xff]
      %v541 = vld [vmem:[%s506 + $0x61] sm:$0xff]
      %v542 = vld [vmem:[%s506 + $0x71] sm:$0xff]
      %v543 = vlaneseq
      %v544 = vshrl.u32 %v543, 7
      %v545 = vsub.s32 1, %v544
      %v546 = vrot.slane %v77, %v545
      %v547 = vmul.f32 %v535, %v546
      %v548 = vmul.f32 %v536, %v546
      %v549 = vmul.f32 %v537, %v546
      %v550 = vmul.f32 %v538, %v546
      %v551 = vmul.f32 %v539, %v546
      %v552 = vmul.f32 %v540, %v546
      %v553 = vmul.f32 %v541, %v546
      %v554 = vmul.f32 %v542, %v546
      %v555 = vadd.f32 %v527, %v547
      %v556 = vadd.f32 %v528, %v548
      %v557 = vadd.f32 %v529, %v549
      %v558 = vadd.f32 %v530, %v550
      %v559 = vadd.f32 %v531, %v551
      %v560 = vadd.f32 %v532, %v552
      %v561 = vadd.f32 %v533, %v553
      %v562 = vadd.f32 %v534, %v554
      %v563 = vld [vmem:[%s506 + $0x2] sm:$0xff]
      %v564 = vld [vmem:[%s506 + $0x12] sm:$0xff]
      %v565 = vld [vmem:[%s506 + $0x22] sm:$0xff]
      %v566 = vld [vmem:[%s506 + $0x32] sm:$0xff]
      %v567 = vld [vmem:[%s506 + $0x42] sm:$0xff]
      %v568 = vld [vmem:[%s506 + $0x52] sm:$0xff]
      %v569 = vld [vmem:[%s506 + $0x62] sm:$0xff]
      %v570 = vld [vmem:[%s506 + $0x72] sm:$0xff]
      %v571 = vlaneseq
      %v572 = vshrl.u32 %v571, 7
      %v573 = vsub.s32 2, %v572
      %v574 = vrot.slane %v77, %v573
      %v575 = vmul.f32 %v563, %v574
      %v576 = vmul.f32 %v564, %v574
      %v577 = vmul.f32 %v565, %v574
      %v578 = vmul.f32 %v566, %v574
      %v579 = vmul.f32 %v567, %v574
      %v580 = vmul.f32 %v568, %v574
      %v581 = vmul.f32 %v569, %v574
      %v582 = vmul.f32 %v570, %v574
      %v583 = vadd.f32 %v555, %v575
      %v584 = vadd.f32 %v556, %v576
      %v585 = vadd.f32 %v557, %v577
      %v586 = vadd.f32 %v558, %v578
      %v587 = vadd.f32 %v559, %v579
      %v588 = vadd.f32 %v560, %v580
      %v589 = vadd.f32 %v561, %v581
      %v590 = vadd.f32 %v562, %v582
      %v591 = vld [vmem:[%s506 + $0x3] sm:$0xff]
      %v592 = vld [vmem:[%s506 + $0x13] sm:$0xff]
      %v593 = vld [vmem:[%s506 + $0x23] sm:$0xff]
      %v594 = vld [vmem:[%s506 + $0x33] sm:$0xff]
      %v595 = vld [vmem:[%s506 + $0x43] sm:$0xff]
      %v596 = vld [vmem:[%s506 + $0x53] sm:$0xff]
      %v597 = vld [vmem:[%s506 + $0x63] sm:$0xff]
      %v598 = vld [vmem:[%s506 + $0x73] sm:$0xff]
      %v599 = vlaneseq
      %v600 = vshrl.u32 %v599, 7
      %v601 = vsub.s32 3, %v600
      %v602 = vrot.slane %v77, %v601
      %v603 = vmul.f32 %v591, %v602
      %v604 = vmul.f32 %v592, %v602
      %v605 = vmul.f32 %v593, %v602
      %v606 = vmul.f32 %v594, %v602
      %v607 = vmul.f32 %v595, %v602
      %v608 = vmul.f32 %v596, %v602
      %v609 = vmul.f32 %v597, %v602
      %v610 = vmul.f32 %v598, %v602
      %v611 = vadd.f32 %v583, %v603
      %v612 = vadd.f32 %v584, %v604
      %v613 = vadd.f32 %v585, %v605
      %v614 = vadd.f32 %v586, %v606
      %v615 = vadd.f32 %v587, %v607
      %v616 = vadd.f32 %v588, %v608
      %v617 = vadd.f32 %v589, %v609
      %v618 = vadd.f32 %v590, %v610
      %v619 = vld [vmem:[%s506 + $0x4] sm:$0xff]
      %v620 = vld [vmem:[%s506 + $0x14] sm:$0xff]
      %v621 = vld [vmem:[%s506 + $0x24] sm:$0xff]
      %v622 = vld [vmem:[%s506 + $0x34] sm:$0xff]
      %v623 = vld [vmem:[%s506 + $0x44] sm:$0xff]
      %v624 = vld [vmem:[%s506 + $0x54] sm:$0xff]
      %v625 = vld [vmem:[%s506 + $0x64] sm:$0xff]
      %v626 = vld [vmem:[%s506 + $0x74] sm:$0xff]
      %v627 = vlaneseq
      %v628 = vshrl.u32 %v627, 7
      %v629 = vsub.s32 4, %v628
      %v630 = vrot.slane %v77, %v629
      %v631 = vmul.f32 %v619, %v630
      %v632 = vmul.f32 %v620, %v630
      %v633 = vmul.f32 %v621, %v630
      %v634 = vmul.f32 %v622, %v630
      %v635 = vmul.f32 %v623, %v630
      %v636 = vmul.f32 %v624, %v630
      %v637 = vmul.f32 %v625, %v630
      %v638 = vmul.f32 %v626, %v630
      %v639 = vadd.f32 %v611, %v631
      %v640 = vadd.f32 %v612, %v632
      %v641 = vadd.f32 %v613, %v633
      %v642 = vadd.f32 %v614, %v634
      %v643 = vadd.f32 %v615, %v635
      %v644 = vadd.f32 %v616, %v636
      %v645 = vadd.f32 %v617, %v637
      %v646 = vadd.f32 %v618, %v638
      %v647 = vld [vmem:[%s506 + $0x5] sm:$0xff]
      %v648 = vld [vmem:[%s506 + $0x15] sm:$0xff]
      %v649 = vld [vmem:[%s506 + $0x25] sm:$0xff]
      %v650 = vld [vmem:[%s506 + $0x35] sm:$0xff]
      %v651 = vld [vmem:[%s506 + $0x45] sm:$0xff]
      %v652 = vld [vmem:[%s506 + $0x55] sm:$0xff]
      %v653 = vld [vmem:[%s506 + $0x65] sm:$0xff]
      %v654 = vld [vmem:[%s506 + $0x75] sm:$0xff]
      %v655 = vlaneseq
      %v656 = vshrl.u32 %v655, 7
      %v657 = vsub.s32 5, %v656
      %v658 = vrot.slane %v77, %v657
      %v659 = vmul.f32 %v647, %v658
      %v660 = vmul.f32 %v648, %v658
      %v661 = vmul.f32 %v649, %v658
      %v662 = vmul.f32 %v650, %v658
      %v663 = vmul.f32 %v651, %v658
      %v664 = vmul.f32 %v652, %v658
      %v665 = vmul.f32 %v653, %v658
      %v666 = vmul.f32 %v654, %v658
      %v667 = vadd.f32 %v639, %v659
      %v668 = vadd.f32 %v640, %v660
      %v669 = vadd.f32 %v641, %v661
      %v670 = vadd.f32 %v642, %v662
      %v671 = vadd.f32 %v643, %v663
      %v672 = vadd.f32 %v644, %v664
      %v673 = vadd.f32 %v645, %v665
      %v674 = vadd.f32 %v646, %v666
      %v675 = vld [vmem:[%s506 + $0x6] sm:$0xff]
      %v676 = vld [vmem:[%s506 + $0x16] sm:$0xff]
      %v677 = vld [vmem:[%s506 + $0x26] sm:$0xff]
      %v678 = vld [vmem:[%s506 + $0x36] sm:$0xff]
      %v679 = vld [vmem:[%s506 + $0x46] sm:$0xff]
      %v680 = vld [vmem:[%s506 + $0x56] sm:$0xff]
      %v681 = vld [vmem:[%s506 + $0x66] sm:$0xff]
      %v682 = vld [vmem:[%s506 + $0x76] sm:$0xff]
      %v683 = vlaneseq
      %v684 = vshrl.u32 %v683, 7
      %v685 = vsub.s32 6, %v684
      %v686 = vrot.slane %v77, %v685
      %v687 = vmul.f32 %v675, %v686
      %v688 = vmul.f32 %v676, %v686
      %v689 = vmul.f32 %v677, %v686
      %v690 = vmul.f32 %v678, %v686
      %v691 = vmul.f32 %v679, %v686
      %v692 = vmul.f32 %v680, %v686
      %v693 = vmul.f32 %v681, %v686
      %v694 = vmul.f32 %v682, %v686
      %v695 = vadd.f32 %v667, %v687
      %v696 = vadd.f32 %v668, %v688
      %v697 = vadd.f32 %v669, %v689
      %v698 = vadd.f32 %v670, %v690
      %v699 = vadd.f32 %v671, %v691
      %v700 = vadd.f32 %v672, %v692
      %v701 = vadd.f32 %v673, %v693
      %v702 = vadd.f32 %v674, %v694
      %v703 = vld [vmem:[%s57] sm:$0xff]
      %v704 = vld [vmem:[%s57 + $0x10] sm:$0xff]
      %v705 = vld [vmem:[%s57 + $0x20] sm:$0xff]
      %v706 = vld [vmem:[%s57 + $0x30] sm:$0xff]
      %v707 = vld [vmem:[%s57 + $0x40] sm:$0xff]
      %v708 = vld [vmem:[%s57 + $0x50] sm:$0xff]
      %v709 = vld [vmem:[%s57 + $0x60] sm:$0xff]
      %v710 = vld [vmem:[%s57 + $0x70] sm:$0xff]
      %v711 = vlaneseq
      %v712 = vshrl.u32 %v711, 7
      %v713 = vsub.s32 0, %v712
      %v714 = vrot.slane %v78, %v713
      %v715 = vmul.f32 %v703, %v714
      %v716 = vmul.f32 %v704, %v714
      %v717 = vmul.f32 %v705, %v714
      %v718 = vmul.f32 %v706, %v714
      %v719 = vmul.f32 %v707, %v714
      %v720 = vmul.f32 %v708, %v714
      %v721 = vmul.f32 %v709, %v714
      %v722 = vmul.f32 %v710, %v714
      %v723 = vadd.f32 %v695, %v715
      %v724 = vadd.f32 %v696, %v716
      %v725 = vadd.f32 %v697, %v717
      %v726 = vadd.f32 %v698, %v718
      %v727 = vadd.f32 %v699, %v719
      %v728 = vadd.f32 %v700, %v720
      %v729 = vadd.f32 %v701, %v721
      %v730 = vadd.f32 %v702, %v722
      %v731 = vld [vmem:[%s57 + $0x1] sm:$0xff]
      %v732 = vld [vmem:[%s57 + $0x11] sm:$0xff]
      %v733 = vld [vmem:[%s57 + $0x21] sm:$0xff]
      %v734 = vld [vmem:[%s57 + $0x31] sm:$0xff]
      %v735 = vld [vmem:[%s57 + $0x41] sm:$0xff]
      %v736 = vld [vmem:[%s57 + $0x51] sm:$0xff]
      %v737 = vld [vmem:[%s57 + $0x61] sm:$0xff]
      %v738 = vld [vmem:[%s57 + $0x71] sm:$0xff]
      %v739 = vlaneseq
      %v740 = vshrl.u32 %v739, 7
      %v741 = vsub.s32 1, %v740
      %v742 = vrot.slane %v78, %v741
      %v743 = vmul.f32 %v731, %v742
      %v744 = vmul.f32 %v732, %v742
      %v745 = vmul.f32 %v733, %v742
      %v746 = vmul.f32 %v734, %v742
      %v747 = vmul.f32 %v735, %v742
      %v748 = vmul.f32 %v736, %v742
      %v749 = vmul.f32 %v737, %v742
      %v750 = vmul.f32 %v738, %v742
      %v751 = vadd.f32 %v723, %v743
      %v752 = vadd.f32 %v724, %v744
      %v753 = vadd.f32 %v725, %v745
      %v754 = vadd.f32 %v726, %v746
      %v755 = vadd.f32 %v727, %v747
      %v756 = vadd.f32 %v728, %v748
      %v757 = vadd.f32 %v729, %v749
      %v758 = vadd.f32 %v730, %v750
      %v759 = vld [vmem:[%s57 + $0x2] sm:$0xff]
      %v760 = vld [vmem:[%s57 + $0x12] sm:$0xff]
      %v761 = vld [vmem:[%s57 + $0x22] sm:$0xff]
      %v762 = vld [vmem:[%s57 + $0x32] sm:$0xff]
      %v763 = vld [vmem:[%s57 + $0x42] sm:$0xff]
      %v764 = vld [vmem:[%s57 + $0x52] sm:$0xff]
      %v765 = vld [vmem:[%s57 + $0x62] sm:$0xff]
      %v766 = vld [vmem:[%s57 + $0x72] sm:$0xff]
      %v767 = vlaneseq
      %v768 = vshrl.u32 %v767, 7
      %v769 = vsub.s32 2, %v768
      %v770 = vrot.slane %v78, %v769
      %v771 = vmul.f32 %v759, %v770
      %v772 = vmul.f32 %v760, %v770
      %v773 = vmul.f32 %v761, %v770
      %v774 = vmul.f32 %v762, %v770
      %v775 = vmul.f32 %v763, %v770
      %v776 = vmul.f32 %v764, %v770
      %v777 = vmul.f32 %v765, %v770
      %v778 = vmul.f32 %v766, %v770
      %v779 = vadd.f32 %v751, %v771
      %v780 = vadd.f32 %v752, %v772
      %v781 = vadd.f32 %v753, %v773
      %v782 = vadd.f32 %v754, %v774
      %v783 = vadd.f32 %v755, %v775
      %v784 = vadd.f32 %v756, %v776
      %v785 = vadd.f32 %v757, %v777
      %v786 = vadd.f32 %v758, %v778
      %v787 = vld [vmem:[%s57 + $0x3] sm:$0xff]
      %v788 = vld [vmem:[%s57 + $0x13] sm:$0xff]
      %v789 = vld [vmem:[%s57 + $0x23] sm:$0xff]
      %v790 = vld [vmem:[%s57 + $0x33] sm:$0xff]
      %v791 = vld [vmem:[%s57 + $0x43] sm:$0xff]
      %v792 = vld [vmem:[%s57 + $0x53] sm:$0xff]
      %v793 = vld [vmem:[%s57 + $0x63] sm:$0xff]
      %v794 = vld [vmem:[%s57 + $0x73] sm:$0xff]
      %v795 = vlaneseq
      %v796 = vshrl.u32 %v795, 7
      %v797 = vsub.s32 3, %v796
      %v798 = vrot.slane %v78, %v797
      %v799 = vmul.f32 %v787, %v798
      %v800 = vmul.f32 %v788, %v798
      %v801 = vmul.f32 %v789, %v798
      %v802 = vmul.f32 %v790, %v798
      %v803 = vmul.f32 %v791, %v798
      %v804 = vmul.f32 %v792, %v798
      %v805 = vmul.f32 %v793, %v798
      %v806 = vmul.f32 %v794, %v798
      %v807 = vadd.f32 %v779, %v799
      %v808 = vadd.f32 %v780, %v800
      %v809 = vadd.f32 %v781, %v801
      %v810 = vadd.f32 %v782, %v802
      %v811 = vadd.f32 %v783, %v803
      %v812 = vadd.f32 %v784, %v804
      %v813 = vadd.f32 %v785, %v805
      %v814 = vadd.f32 %v786, %v806
      %v815 = vld [vmem:[%s57 + $0x4] sm:$0xff]
      %v816 = vld [vmem:[%s57 + $0x14] sm:$0xff]
      %v817 = vld [vmem:[%s57 + $0x24] sm:$0xff]
      %v818 = vld [vmem:[%s57 + $0x34] sm:$0xff]
      %v819 = vld [vmem:[%s57 + $0x44] sm:$0xff]
      %v820 = vld [vmem:[%s57 + $0x54] sm:$0xff]
      %v821 = vld [vmem:[%s57 + $0x64] sm:$0xff]
      %v822 = vld [vmem:[%s57 + $0x74] sm:$0xff]
      %v823 = vlaneseq
      %v824 = vshrl.u32 %v823, 7
      %v825 = vsub.s32 4, %v824
      %v826 = vrot.slane %v78, %v825
      %v827 = vmul.f32 %v815, %v826
      %v828 = vmul.f32 %v816, %v826
      %v829 = vmul.f32 %v817, %v826
      %v830 = vmul.f32 %v818, %v826
      %v831 = vmul.f32 %v819, %v826
      %v832 = vmul.f32 %v820, %v826
      %v833 = vmul.f32 %v821, %v826
      %v834 = vmul.f32 %v822, %v826
      %v835 = vadd.f32 %v807, %v827
      %v836 = vadd.f32 %v808, %v828
      %v837 = vadd.f32 %v809, %v829
      %v838 = vadd.f32 %v810, %v830
      %v839 = vadd.f32 %v811, %v831
      %v840 = vadd.f32 %v812, %v832
      %v841 = vadd.f32 %v813, %v833
      %v842 = vadd.f32 %v814, %v834
      %v843 = vld [vmem:[%s57 + $0x5] sm:$0xff]
      %v844 = vld [vmem:[%s57 + $0x15] sm:$0xff]
      %v845 = vld [vmem:[%s57 + $0x25] sm:$0xff]
      %v846 = vld [vmem:[%s57 + $0x35] sm:$0xff]
      %v847 = vld [vmem:[%s57 + $0x45] sm:$0xff]
      %v848 = vld [vmem:[%s57 + $0x55] sm:$0xff]
      %v849 = vld [vmem:[%s57 + $0x65] sm:$0xff]
      %v850 = vld [vmem:[%s57 + $0x75] sm:$0xff]
      %v851 = vlaneseq
      %v852 = vshrl.u32 %v851, 7
      %v853 = vsub.s32 5, %v852
      %v854 = vrot.slane %v78, %v853
      %v855 = vmul.f32 %v843, %v854
      %v856 = vmul.f32 %v844, %v854
      %v857 = vmul.f32 %v845, %v854
      %v858 = vmul.f32 %v846, %v854
      %v859 = vmul.f32 %v847, %v854
      %v860 = vmul.f32 %v848, %v854
      %v861 = vmul.f32 %v849, %v854
      %v862 = vmul.f32 %v850, %v854
      %v863 = vadd.f32 %v835, %v855
      %v864 = vadd.f32 %v836, %v856
      %v865 = vadd.f32 %v837, %v857
      %v866 = vadd.f32 %v838, %v858
      %v867 = vadd.f32 %v839, %v859
      %v868 = vadd.f32 %v840, %v860
      %v869 = vadd.f32 %v841, %v861
      %v870 = vadd.f32 %v842, %v862
      %v871 = vld [vmem:[%s57 + $0x6] sm:$0xff]
      %v872 = vld [vmem:[%s57 + $0x16] sm:$0xff]
      %v873 = vld [vmem:[%s57 + $0x26] sm:$0xff]
      %v874 = vld [vmem:[%s57 + $0x36] sm:$0xff]
      %v875 = vld [vmem:[%s57 + $0x46] sm:$0xff]
      %v876 = vld [vmem:[%s57 + $0x56] sm:$0xff]
      %v877 = vld [vmem:[%s57 + $0x66] sm:$0xff]
      %v878 = vld [vmem:[%s57 + $0x76] sm:$0xff]
      %v879 = vlaneseq
      %v880 = vshrl.u32 %v879, 7
      %v881 = vsub.s32 6, %v880
      %v882 = vrot.slane %v78, %v881
      %v883 = vmul.f32 %v871, %v882
      %v884 = vmul.f32 %v872, %v882
      %v885 = vmul.f32 %v873, %v882
      %v886 = vmul.f32 %v874, %v882
      %v887 = vmul.f32 %v875, %v882
      %v888 = vmul.f32 %v876, %v882
      %v889 = vmul.f32 %v877, %v882
      %v890 = vmul.f32 %v878, %v882
      %v891 = vadd.f32 %v863, %v883
      %v892 = vadd.f32 %v864, %v884
      %v893 = vadd.f32 %v865, %v885
      %v894 = vadd.f32 %v866, %v886
      %v895 = vadd.f32 %v867, %v887
      %v896 = vadd.f32 %v868, %v888
      %v897 = vadd.f32 %v869, %v889
      %v898 = vadd.f32 %v870, %v890
      %s899 = scalar_lea.vmem [#allocation2], 64
      %v900 = vld [vmem:[%s899] sm:$0xff]
      %v901 = vld [vmem:[%s899 + $0x10] sm:$0xff]
      %v902 = vld [vmem:[%s899 + $0x20] sm:$0xff]
      %v903 = vld [vmem:[%s899 + $0x30] sm:$0xff]
      %v904 = vld [vmem:[%s899 + $0x40] sm:$0xff]
      %v905 = vld [vmem:[%s899 + $0x50] sm:$0xff]
      %v906 = vld [vmem:[%s899 + $0x60] sm:$0xff]
      %v907 = vld [vmem:[%s899 + $0x70] sm:$0xff]
      %v908 = vlaneseq
      %v909 = vshrl.u32 %v908, 7
      %v910 = vsub.s32 0, %v909
      %v911 = vrot.slane %v79, %v910
      %v912 = vmul.f32 %v900, %v911
      %v913 = vmul.f32 %v901, %v911
      %v914 = vmul.f32 %v902, %v911
      %v915 = vmul.f32 %v903, %v911
      %v916 = vmul.f32 %v904, %v911
      %v917 = vmul.f32 %v905, %v911
      %v918 = vmul.f32 %v906, %v911
      %v919 = vmul.f32 %v907, %v911
      %v920 = vadd.f32 %v891, %v912
      %v921 = vadd.f32 %v892, %v913
      %v922 = vadd.f32 %v893, %v914
      %v923 = vadd.f32 %v894, %v915
      %v924 = vadd.f32 %v895, %v916
      %v925 = vadd.f32 %v896, %v917
      %v926 = vadd.f32 %v897, %v918
      %v927 = vadd.f32 %v898, %v919
      %v928 = vld [vmem:[%s899 + $0x1] sm:$0xff]
      %v929 = vld [vmem:[%s899 + $0x11] sm:$0xff]
      %v930 = vld [vmem:[%s899 + $0x21] sm:$0xff]
      %v931 = vld [vmem:[%s899 + $0x31] sm:$0xff]
      %v932 = vld [vmem:[%s899 + $0x41] sm:$0xff]
      %v933 = vld [vmem:[%s899 + $0x51] sm:$0xff]
      %v934 = vld [vmem:[%s899 + $0x61] sm:$0xff]
      %v935 = vld [vmem:[%s899 + $0x71] sm:$0xff]
      %v936 = vlaneseq
      %v937 = vshrl.u32 %v936, 7
      %v938 = vsub.s32 1, %v937
      %v939 = vrot.slane %v79, %v938
      %v940 = vmul.f32 %v928, %v939
      %v941 = vmul.f32 %v929, %v939
      %v942 = vmul.f32 %v930, %v939
      %v943 = vmul.f32 %v931, %v939
      %v944 = vmul.f32 %v932, %v939
      %v945 = vmul.f32 %v933, %v939
      %v946 = vmul.f32 %v934, %v939
      %v947 = vmul.f32 %v935, %v939
      %v948 = vadd.f32 %v920, %v940
      %v949 = vadd.f32 %v921, %v941
      %v950 = vadd.f32 %v922, %v942
      %v951 = vadd.f32 %v923, %v943
      %v952 = vadd.f32 %v924, %v944
      %v953 = vadd.f32 %v925, %v945
      %v954 = vadd.f32 %v926, %v946
      %v955 = vadd.f32 %v927, %v947
      %v956 = vld [vmem:[%s899 + $0x2] sm:$0xff]
      %v957 = vld [vmem:[%s899 + $0x12] sm:$0xff]
      %v958 = vld [vmem:[%s899 + $0x22] sm:$0xff]
      %v959 = vld [vmem:[%s899 + $0x32] sm:$0xff]
      %v960 = vld [vmem:[%s899 + $0x42] sm:$0xff]
      %v961 = vld [vmem:[%s899 + $0x52] sm:$0xff]
      %v962 = vld [vmem:[%s899 + $0x62] sm:$0xff]
      %v963 = vld [vmem:[%s899 + $0x72] sm:$0xff]
      %v964 = vlaneseq
      %v965 = vshrl.u32 %v964, 7
      %v966 = vsub.s32 2, %v965
      %v967 = vrot.slane %v79, %v966
      %v968 = vmul.f32 %v956, %v967
      %v969 = vmul.f32 %v957, %v967
      %v970 = vmul.f32 %v958, %v967
      %v971 = vmul.f32 %v959, %v967
      %v972 = vmul.f32 %v960, %v967
      %v973 = vmul.f32 %v961, %v967
      %v974 = vmul.f32 %v962, %v967
      %v975 = vmul.f32 %v963, %v967
      %v976 = vadd.f32 %v948, %v968
      %v977 = vadd.f32 %v949, %v969
      %v978 = vadd.f32 %v950, %v970
      %v979 = vadd.f32 %v951, %v971
      %v980 = vadd.f32 %v952, %v972
      %v981 = vadd.f32 %v953, %v973
      %v982 = vadd.f32 %v954, %v974
      %v983 = vadd.f32 %v955, %v975
      %v984 = vld [vmem:[%s899 + $0x3] sm:$0xff]
      %v985 = vld [vmem:[%s899 + $0x13] sm:$0xff]
      %v986 = vld [vmem:[%s899 + $0x23] sm:$0xff]
      %v987 = vld [vmem:[%s899 + $0x33] sm:$0xff]
      %v988 = vld [vmem:[%s899 + $0x43] sm:$0xff]
      %v989 = vld [vmem:[%s899 + $0x53] sm:$0xff]
      %v990 = vld [vmem:[%s899 + $0x63] sm:$0xff]
      %v991 = vld [vmem:[%s899 + $0x73] sm:$0xff]
      %v992 = vlaneseq
      %v993 = vshrl.u32 %v992, 7
      %v994 = vsub.s32 3, %v993
      %v995 = vrot.slane %v79, %v994
      %v996 = vmul.f32 %v984, %v995
      %v997 = vmul.f32 %v985, %v995
      %v998 = vmul.f32 %v986, %v995
      %v999 = vmul.f32 %v987, %v995
      %v1000 = vmul.f32 %v988, %v995
      %v1001 = vmul.f32 %v989, %v995
      %v1002 = vmul.f32 %v990, %v995
      %v1003 = vmul.f32 %v991, %v995
      %v1004 = vadd.f32 %v976, %v996
      %v1005 = vadd.f32 %v977, %v997
      %v1006 = vadd.f32 %v978, %v998
      %v1007 = vadd.f32 %v979, %v999
      %v1008 = vadd.f32 %v980, %v1000
      %v1009 = vadd.f32 %v981, %v1001
      %v1010 = vadd.f32 %v982, %v1002
      %v1011 = vadd.f32 %v983, %v1003
      %v1012 = vld [vmem:[%s899 + $0x4] sm:$0xff]
      %v1013 = vld [vmem:[%s899 + $0x14] sm:$0xff]
      %v1014 = vld [vmem:[%s899 + $0x24] sm:$0xff]
      %v1015 = vld [vmem:[%s899 + $0x34] sm:$0xff]
      %v1016 = vld [vmem:[%s899 + $0x44] sm:$0xff]
      %v1017 = vld [vmem:[%s899 + $0x54] sm:$0xff]
      %v1018 = vld [vmem:[%s899 + $0x64] sm:$0xff]
      %v1019 = vld [vmem:[%s899 + $0x74] sm:$0xff]
      %v1020 = vlaneseq
      %v1021 = vshrl.u32 %v1020, 7
      %v1022 = vsub.s32 4, %v1021
      %v1023 = vrot.slane %v79, %v1022
      %v1024 = vmul.f32 %v1012, %v1023
      %v1025 = vmul.f32 %v1013, %v1023
      %v1026 = vmul.f32 %v1014, %v1023
      %v1027 = vmul.f32 %v1015, %v1023
      %v1028 = vmul.f32 %v1016, %v1023
      %v1029 = vmul.f32 %v1017, %v1023
      %v1030 = vmul.f32 %v1018, %v1023
      %v1031 = vmul.f32 %v1019, %v1023
      %v1032 = vadd.f32 %v1004, %v1024
      %v1033 = vadd.f32 %v1005, %v1025
      %v1034 = vadd.f32 %v1006, %v1026
      %v1035 = vadd.f32 %v1007, %v1027
      %v1036 = vadd.f32 %v1008, %v1028
      %v1037 = vadd.f32 %v1009, %v1029
      %v1038 = vadd.f32 %v1010, %v1030
      %v1039 = vadd.f32 %v1011, %v1031
      %v1040 = vld [vmem:[%s899 + $0x5] sm:$0xff]
      %v1041 = vld [vmem:[%s899 + $0x15] sm:$0xff]
      %v1042 = vld [vmem:[%s899 + $0x25] sm:$0xff]
      %v1043 = vld [vmem:[%s899 + $0x35] sm:$0xff]
      %v1044 = vld [vmem:[%s899 + $0x45] sm:$0xff]
      %v1045 = vld [vmem:[%s899 + $0x55] sm:$0xff]
      %v1046 = vld [vmem:[%s899 + $0x65] sm:$0xff]
      %v1047 = vld [vmem:[%s899 + $0x75] sm:$0xff]
      %v1048 = vlaneseq
      %v1049 = vshrl.u32 %v1048, 7
      %v1050 = vsub.s32 5, %v1049
      %v1051 = vrot.slane %v79, %v1050
      %v1052 = vmul.f32 %v1040, %v1051
      %v1053 = vmul.f32 %v1041, %v1051
      %v1054 = vmul.f32 %v1042, %v1051
      %v1055 = vmul.f32 %v1043, %v1051
      %v1056 = vmul.f32 %v1044, %v1051
      %v1057 = vmul.f32 %v1045, %v1051
      %v1058 = vmul.f32 %v1046, %v1051
      %v1059 = vmul.f32 %v1047, %v1051
      %v1060 = vadd.f32 %v1032, %v1052
      %v1061 = vadd.f32 %v1033, %v1053
      %v1062 = vadd.f32 %v1034, %v1054
      %v1063 = vadd.f32 %v1035, %v1055
      %v1064 = vadd.f32 %v1036, %v1056
      %v1065 = vadd.f32 %v1037, %v1057
      %v1066 = vadd.f32 %v1038, %v1058
      %v1067 = vadd.f32 %v1039, %v1059
      %v1068 = vld [vmem:[%s899 + $0x6] sm:$0xff]
      %v1069 = vld [vmem:[%s899 + $0x16] sm:$0xff]
      %v1070 = vld [vmem:[%s899 + $0x26] sm:$0xff]
      %v1071 = vld [vmem:[%s899 + $0x36] sm:$0xff]
      %v1072 = vld [vmem:[%s899 + $0x46] sm:$0xff]
      %v1073 = vld [vmem:[%s899 + $0x56] sm:$0xff]
      %v1074 = vld [vmem:[%s899 + $0x66] sm:$0xff]
      %v1075 = vld [vmem:[%s899 + $0x76] sm:$0xff]
      %v1076 = vlaneseq
      %v1077 = vshrl.u32 %v1076, 7
      %v1078 = vsub.s32 6, %v1077
      %v1079 = vrot.slane %v79, %v1078
      %v1080 = vmul.f32 %v1068, %v1079
      %v1081 = vmul.f32 %v1069, %v1079
      %v1082 = vmul.f32 %v1070, %v1079
      %v1083 = vmul.f32 %v1071, %v1079
      %v1084 = vmul.f32 %v1072, %v1079
      %v1085 = vmul.f32 %v1073, %v1079
      %v1086 = vmul.f32 %v1074, %v1079
      %v1087 = vmul.f32 %v1075, %v1079
      %v1088 = vadd.f32 %v1060, %v1080
      %v1089 = vadd.f32 %v1061, %v1081
      %v1090 = vadd.f32 %v1062, %v1082
      %v1091 = vadd.f32 %v1063, %v1083
      %v1092 = vadd.f32 %v1064, %v1084
      %v1093 = vadd.f32 %v1065, %v1085
      %v1094 = vadd.f32 %v1066, %v1086
      %v1095 = vadd.f32 %v1067, %v1087
      %s1096 = scalar_lea.vmem [#allocation2], 80
      %v1097 = vld [vmem:[%s1096] sm:$0xff]
      %v1098 = vld [vmem:[%s1096 + $0x10] sm:$0xff]
      %v1099 = vld [vmem:[%s1096 + $0x20] sm:$0xff]
      %v1100 = vld [vmem:[%s1096 + $0x30] sm:$0xff]
      %v1101 = vld [vmem:[%s1096 + $0x40] sm:$0xff]
      %v1102 = vld [vmem:[%s1096 + $0x50] sm:$0xff]
      %v1103 = vld [vmem:[%s1096 + $0x60] sm:$0xff]
      %v1104 = vld [vmem:[%s1096 + $0x70] sm:$0xff]
      %v1105 = vlaneseq
      %v1106 = vshrl.u32 %v1105, 7
      %v1107 = vsub.s32 0, %v1106
      %v1108 = vrot.slane %v80, %v1107
      %v1109 = vmul.f32 %v1097, %v1108
      %v1110 = vmul.f32 %v1098, %v1108
      %v1111 = vmul.f32 %v1099, %v1108
      %v1112 = vmul.f32 %v1100, %v1108
      %v1113 = vmul.f32 %v1101, %v1108
      %v1114 = vmul.f32 %v1102, %v1108
      %v1115 = vmul.f32 %v1103, %v1108
      %v1116 = vmul.f32 %v1104, %v1108
      %v1117 = vadd.f32 %v1088, %v1109
      %v1118 = vadd.f32 %v1089, %v1110
      %v1119 = vadd.f32 %v1090, %v1111
      %v1120 = vadd.f32 %v1091, %v1112
      %v1121 = vadd.f32 %v1092, %v1113
      %v1122 = vadd.f32 %v1093, %v1114
      %v1123 = vadd.f32 %v1094, %v1115
      %v1124 = vadd.f32 %v1095, %v1116
      %v1125 = vld [vmem:[%s1096 + $0x1] sm:$0xff]
      %v1126 = vld [vmem:[%s1096 + $0x11] sm:$0xff]
      %v1127 = vld [vmem:[%s1096 + $0x21] sm:$0xff]
      %v1128 = vld [vmem:[%s1096 + $0x31] sm:$0xff]
      %v1129 = vld [vmem:[%s1096 + $0x41] sm:$0xff]
      %v1130 = vld [vmem:[%s1096 + $0x51] sm:$0xff]
      %v1131 = vld [vmem:[%s1096 + $0x61] sm:$0xff]
      %v1132 = vld [vmem:[%s1096 + $0x71] sm:$0xff]
      %v1133 = vlaneseq
      %v1134 = vshrl.u32 %v1133, 7
      %v1135 = vsub.s32 1, %v1134
      %v1136 = vrot.slane %v80, %v1135
      %v1137 = vmul.f32 %v1125, %v1136
      %v1138 = vmul.f32 %v1126, %v1136
      %v1139 = vmul.f32 %v1127, %v1136
      %v1140 = vmul.f32 %v1128, %v1136
      %v1141 = vmul.f32 %v1129, %v1136
      %v1142 = vmul.f32 %v1130, %v1136
      %v1143 = vmul.f32 %v1131, %v1136
      %v1144 = vmul.f32 %v1132, %v1136
      %v1145 = vadd.f32 %v1117, %v1137
      %v1146 = vadd.f32 %v1118, %v1138
      %v1147 = vadd.f32 %v1119, %v1139
      %v1148 = vadd.f32 %v1120, %v1140
      %v1149 = vadd.f32 %v1121, %v1141
      %v1150 = vadd.f32 %v1122, %v1142
      %v1151 = vadd.f32 %v1123, %v1143
      %v1152 = vadd.f32 %v1124, %v1144
      %v1153 = vld [vmem:[%s1096 + $0x2] sm:$0xff]
      %v1154 = vld [vmem:[%s1096 + $0x12] sm:$0xff]
      %v1155 = vld [vmem:[%s1096 + $0x22] sm:$0xff]
      %v1156 = vld [vmem:[%s1096 + $0x32] sm:$0xff]
      %v1157 = vld [vmem:[%s1096 + $0x42] sm:$0xff]
      %v1158 = vld [vmem:[%s1096 + $0x52] sm:$0xff]
      %v1159 = vld [vmem:[%s1096 + $0x62] sm:$0xff]
      %v1160 = vld [vmem:[%s1096 + $0x72] sm:$0xff]
      %v1161 = vlaneseq
      %v1162 = vshrl.u32 %v1161, 7
      %v1163 = vsub.s32 2, %v1162
      %v1164 = vrot.slane %v80, %v1163
      %v1165 = vmul.f32 %v1153, %v1164
      %v1166 = vmul.f32 %v1154, %v1164
      %v1167 = vmul.f32 %v1155, %v1164
      %v1168 = vmul.f32 %v1156, %v1164
      %v1169 = vmul.f32 %v1157, %v1164
      %v1170 = vmul.f32 %v1158, %v1164
      %v1171 = vmul.f32 %v1159, %v1164
      %v1172 = vmul.f32 %v1160, %v1164
      %v1173 = vadd.f32 %v1145, %v1165
      %v1174 = vadd.f32 %v1146, %v1166
      %v1175 = vadd.f32 %v1147, %v1167
      %v1176 = vadd.f32 %v1148, %v1168
      %v1177 = vadd.f32 %v1149, %v1169
      %v1178 = vadd.f32 %v1150, %v1170
      %v1179 = vadd.f32 %v1151, %v1171
      %v1180 = vadd.f32 %v1152, %v1172
      %v1181 = vld [vmem:[%s1096 + $0x3] sm:$0xff]
      %v1182 = vld [vmem:[%s1096 + $0x13] sm:$0xff]
      %v1183 = vld [vmem:[%s1096 + $0x23] sm:$0xff]
      %v1184 = vld [vmem:[%s1096 + $0x33] sm:$0xff]
      %v1185 = vld [vmem:[%s1096 + $0x43] sm:$0xff]
      %v1186 = vld [vmem:[%s1096 + $0x53] sm:$0xff]
      %v1187 = vld [vmem:[%s1096 + $0x63] sm:$0xff]
      %v1188 = vld [vmem:[%s1096 + $0x73] sm:$0xff]
      %v1189 = vlaneseq
      %v1190 = vshrl.u32 %v1189, 7
      %v1191 = vsub.s32 3, %v1190
      %v1192 = vrot.slane %v80, %v1191
      %v1193 = vmul.f32 %v1181, %v1192
      %v1194 = vmul.f32 %v1182, %v1192
      %v1195 = vmul.f32 %v1183, %v1192
      %v1196 = vmul.f32 %v1184, %v1192
      %v1197 = vmul.f32 %v1185, %v1192
      %v1198 = vmul.f32 %v1186, %v1192
      %v1199 = vmul.f32 %v1187, %v1192
      %v1200 = vmul.f32 %v1188, %v1192
      %v1201 = vadd.f32 %v1173, %v1193
      %v1202 = vadd.f32 %v1174, %v1194
      %v1203 = vadd.f32 %v1175, %v1195
      %v1204 = vadd.f32 %v1176, %v1196
      %v1205 = vadd.f32 %v1177, %v1197
      %v1206 = vadd.f32 %v1178, %v1198
      %v1207 = vadd.f32 %v1179, %v1199
      %v1208 = vadd.f32 %v1180, %v1200
      %v1209 = vld [vmem:[%s1096 + $0x4] sm:$0xff]
      %v1210 = vld [vmem:[%s1096 + $0x14] sm:$0xff]
      %v1211 = vld [vmem:[%s1096 + $0x24] sm:$0xff]
      %v1212 = vld [vmem:[%s1096 + $0x34] sm:$0xff]
      %v1213 = vld [vmem:[%s1096 + $0x44] sm:$0xff]
      %v1214 = vld [vmem:[%s1096 + $0x54] sm:$0xff]
      %v1215 = vld [vmem:[%s1096 + $0x64] sm:$0xff]
      %v1216 = vld [vmem:[%s1096 + $0x74] sm:$0xff]
      %v1217 = vlaneseq
      %v1218 = vshrl.u32 %v1217, 7
      %v1219 = vsub.s32 4, %v1218
      %v1220 = vrot.slane %v80, %v1219
      %v1221 = vmul.f32 %v1209, %v1220
      %v1222 = vmul.f32 %v1210, %v1220
      %v1223 = vmul.f32 %v1211, %v1220
      %v1224 = vmul.f32 %v1212, %v1220
      %v1225 = vmul.f32 %v1213, %v1220
      %v1226 = vmul.f32 %v1214, %v1220
      %v1227 = vmul.f32 %v1215, %v1220
      %v1228 = vmul.f32 %v1216, %v1220
      %v1229 = vadd.f32 %v1201, %v1221
      %v1230 = vadd.f32 %v1202, %v1222
      %v1231 = vadd.f32 %v1203, %v1223
      %v1232 = vadd.f32 %v1204, %v1224
      %v1233 = vadd.f32 %v1205, %v1225
      %v1234 = vadd.f32 %v1206, %v1226
      %v1235 = vadd.f32 %v1207, %v1227
      %v1236 = vadd.f32 %v1208, %v1228
      %v1237 = vld [vmem:[%s1096 + $0x5] sm:$0xff]
      %v1238 = vld [vmem:[%s1096 + $0x15] sm:$0xff]
      %v1239 = vld [vmem:[%s1096 + $0x25] sm:$0xff]
      %v1240 = vld [vmem:[%s1096 + $0x35] sm:$0xff]
      %v1241 = vld [vmem:[%s1096 + $0x45] sm:$0xff]
      %v1242 = vld [vmem:[%s1096 + $0x55] sm:$0xff]
      %v1243 = vld [vmem:[%s1096 + $0x65] sm:$0xff]
      %v1244 = vld [vmem:[%s1096 + $0x75] sm:$0xff]
      %v1245 = vlaneseq
      %v1246 = vshrl.u32 %v1245, 7
      %v1247 = vsub.s32 5, %v1246
      %v1248 = vrot.slane %v80, %v1247
      %v1249 = vmul.f32 %v1237, %v1248
      %v1250 = vmul.f32 %v1238, %v1248
      %v1251 = vmul.f32 %v1239, %v1248
      %v1252 = vmul.f32 %v1240, %v1248
      %v1253 = vmul.f32 %v1241, %v1248
      %v1254 = vmul.f32 %v1242, %v1248
      %v1255 = vmul.f32 %v1243, %v1248
      %v1256 = vmul.f32 %v1244, %v1248
      %v1257 = vadd.f32 %v1229, %v1249
      %v1258 = vadd.f32 %v1230, %v1250
      %v1259 = vadd.f32 %v1231, %v1251
      %v1260 = vadd.f32 %v1232, %v1252
      %v1261 = vadd.f32 %v1233, %v1253
      %v1262 = vadd.f32 %v1234, %v1254
      %v1263 = vadd.f32 %v1235, %v1255
      %v1264 = vadd.f32 %v1236, %v1256
      %v1265 = vld [vmem:[%s1096 + $0x6] sm:$0xff]
      %v1266 = vld [vmem:[%s1096 + $0x16] sm:$0xff]
      %v1267 = vld [vmem:[%s1096 + $0x26] sm:$0xff]
      %v1268 = vld [vmem:[%s1096 + $0x36] sm:$0xff]
      %v1269 = vld [vmem:[%s1096 + $0x46] sm:$0xff]
      %v1270 = vld [vmem:[%s1096 + $0x56] sm:$0xff]
      %v1271 = vld [vmem:[%s1096 + $0x66] sm:$0xff]
      %v1272 = vld [vmem:[%s1096 + $0x76] sm:$0xff]
      %v1273 = vlaneseq
      %v1274 = vshrl.u32 %v1273, 7
      %v1275 = vsub.s32 6, %v1274
      %v1276 = vrot.slane %v80, %v1275
      %v1277 = vmul.f32 %v1265, %v1276
      %v1278 = vmul.f32 %v1266, %v1276
      %v1279 = vmul.f32 %v1267, %v1276
      %v1280 = vmul.f32 %v1268, %v1276
      %v1281 = vmul.f32 %v1269, %v1276
      %v1282 = vmul.f32 %v1270, %v1276
      %v1283 = vmul.f32 %v1271, %v1276
      %v1284 = vmul.f32 %v1272, %v1276
      %v1285 = vadd.f32 %v1257, %v1277
      %v1286 = vadd.f32 %v1258, %v1278
      %v1287 = vadd.f32 %v1259, %v1279
      %v1288 = vadd.f32 %v1260, %v1280
      %v1289 = vadd.f32 %v1261, %v1281
      %v1290 = vadd.f32 %v1262, %v1282
      %v1291 = vadd.f32 %v1263, %v1283
      %v1292 = vadd.f32 %v1264, %v1284
      %s1293 = scalar_lea.vmem [#allocation2], 96
      %v1294 = vld [vmem:[%s1293] sm:$0xff]
      %v1295 = vld [vmem:[%s1293 + $0x10] sm:$0xff]
      %v1296 = vld [vmem:[%s1293 + $0x20] sm:$0xff]
      %v1297 = vld [vmem:[%s1293 + $0x30] sm:$0xff]
      %v1298 = vld [vmem:[%s1293 + $0x40] sm:$0xff]
      %v1299 = vld [vmem:[%s1293 + $0x50] sm:$0xff]
      %v1300 = vld [vmem:[%s1293 + $0x60] sm:$0xff]
      %v1301 = vld [vmem:[%s1293 + $0x70] sm:$0xff]
      %v1302 = vlaneseq
      %v1303 = vshrl.u32 %v1302, 7
      %v1304 = vsub.s32 0, %v1303
      %v1305 = vrot.slane %v81, %v1304
      %v1306 = vmul.f32 %v1294, %v1305
      %v1307 = vmul.f32 %v1295, %v1305
      %v1308 = vmul.f32 %v1296, %v1305
      %v1309 = vmul.f32 %v1297, %v1305
      %v1310 = vmul.f32 %v1298, %v1305
      %v1311 = vmul.f32 %v1299, %v1305
      %v1312 = vmul.f32 %v1300, %v1305
      %v1313 = vmul.f32 %v1301, %v1305
      %v1314 = vadd.f32 %v1285, %v1306
      %v1315 = vadd.f32 %v1286, %v1307
      %v1316 = vadd.f32 %v1287, %v1308
      %v1317 = vadd.f32 %v1288, %v1309
      %v1318 = vadd.f32 %v1289, %v1310
      %v1319 = vadd.f32 %v1290, %v1311
      %v1320 = vadd.f32 %v1291, %v1312
      %v1321 = vadd.f32 %v1292, %v1313
      %v1322 = vld [vmem:[%s1293 + $0x1] sm:$0xff]
      %v1323 = vld [vmem:[%s1293 + $0x11] sm:$0xff]
      %v1324 = vld [vmem:[%s1293 + $0x21] sm:$0xff]
      %v1325 = vld [vmem:[%s1293 + $0x31] sm:$0xff]
      %v1326 = vld [vmem:[%s1293 + $0x41] sm:$0xff]
      %v1327 = vld [vmem:[%s1293 + $0x51] sm:$0xff]
      %v1328 = vld [vmem:[%s1293 + $0x61] sm:$0xff]
      %v1329 = vld [vmem:[%s1293 + $0x71] sm:$0xff]
      %v1330 = vlaneseq
      %v1331 = vshrl.u32 %v1330, 7
      %v1332 = vsub.s32 1, %v1331
      %v1333 = vrot.slane %v81, %v1332
      %v1334 = vmul.f32 %v1322, %v1333
      %v1335 = vmul.f32 %v1323, %v1333
      %v1336 = vmul.f32 %v1324, %v1333
      %v1337 = vmul.f32 %v1325, %v1333
      %v1338 = vmul.f32 %v1326, %v1333
      %v1339 = vmul.f32 %v1327, %v1333
      %v1340 = vmul.f32 %v1328, %v1333
      %v1341 = vmul.f32 %v1329, %v1333
      %v1342 = vadd.f32 %v1314, %v1334
      %v1343 = vadd.f32 %v1315, %v1335
      %v1344 = vadd.f32 %v1316, %v1336
      %v1345 = vadd.f32 %v1317, %v1337
      %v1346 = vadd.f32 %v1318, %v1338
      %v1347 = vadd.f32 %v1319, %v1339
      %v1348 = vadd.f32 %v1320, %v1340
      %v1349 = vadd.f32 %v1321, %v1341
      %v1350 = vld [vmem:[%s1293 + $0x2] sm:$0xff]
      %v1351 = vld [vmem:[%s1293 + $0x12] sm:$0xff]
      %v1352 = vld [vmem:[%s1293 + $0x22] sm:$0xff]
      %v1353 = vld [vmem:[%s1293 + $0x32] sm:$0xff]
      %v1354 = vld [vmem:[%s1293 + $0x42] sm:$0xff]
      %v1355 = vld [vmem:[%s1293 + $0x52] sm:$0xff]
      %v1356 = vld [vmem:[%s1293 + $0x62] sm:$0xff]
      %v1357 = vld [vmem:[%s1293 + $0x72] sm:$0xff]
      %v1358 = vlaneseq
      %v1359 = vshrl.u32 %v1358, 7
      %v1360 = vsub.s32 2, %v1359
      %v1361 = vrot.slane %v81, %v1360
      %v1362 = vmul.f32 %v1350, %v1361
      %v1363 = vmul.f32 %v1351, %v1361
      %v1364 = vmul.f32 %v1352, %v1361
      %v1365 = vmul.f32 %v1353, %v1361
      %v1366 = vmul.f32 %v1354, %v1361
      %v1367 = vmul.f32 %v1355, %v1361
      %v1368 = vmul.f32 %v1356, %v1361
      %v1369 = vmul.f32 %v1357, %v1361
      %v1370 = vadd.f32 %v1342, %v1362
      %v1371 = vadd.f32 %v1343, %v1363
      %v1372 = vadd.f32 %v1344, %v1364
      %v1373 = vadd.f32 %v1345, %v1365
      %v1374 = vadd.f32 %v1346, %v1366
      %v1375 = vadd.f32 %v1347, %v1367
      %v1376 = vadd.f32 %v1348, %v1368
      %v1377 = vadd.f32 %v1349, %v1369
      %v1378 = vld [vmem:[%s1293 + $0x3] sm:$0xff]
      %v1379 = vld [vmem:[%s1293 + $0x13] sm:$0xff]
      %v1380 = vld [vmem:[%s1293 + $0x23] sm:$0xff]
      %v1381 = vld [vmem:[%s1293 + $0x33] sm:$0xff]
      %v1382 = vld [vmem:[%s1293 + $0x43] sm:$0xff]
      %v1383 = vld [vmem:[%s1293 + $0x53] sm:$0xff]
      %v1384 = vld [vmem:[%s1293 + $0x63] sm:$0xff]
      %v1385 = vld [vmem:[%s1293 + $0x73] sm:$0xff]
      %v1386 = vlaneseq
      %v1387 = vshrl.u32 %v1386, 7
      %v1388 = vsub.s32 3, %v1387
      %v1389 = vrot.slane %v81, %v1388
      %v1390 = vmul.f32 %v1378, %v1389
      %v1391 = vmul.f32 %v1379, %v1389
      %v1392 = vmul.f32 %v1380, %v1389
      %v1393 = vmul.f32 %v1381, %v1389
      %v1394 = vmul.f32 %v1382, %v1389
      %v1395 = vmul.f32 %v1383, %v1389
      %v1396 = vmul.f32 %v1384, %v1389
      %v1397 = vmul.f32 %v1385, %v1389
      %v1398 = vadd.f32 %v1370, %v1390
      %v1399 = vadd.f32 %v1371, %v1391
      %v1400 = vadd.f32 %v1372, %v1392
      %v1401 = vadd.f32 %v1373, %v1393
      %v1402 = vadd.f32 %v1374, %v1394
      %v1403 = vadd.f32 %v1375, %v1395
      %v1404 = vadd.f32 %v1376, %v1396
      %v1405 = vadd.f32 %v1377, %v1397
      %v1406 = vld [vmem:[%s1293 + $0x4] sm:$0xff]
      %v1407 = vld [vmem:[%s1293 + $0x14] sm:$0xff]
      %v1408 = vld [vmem:[%s1293 + $0x24] sm:$0xff]
      %v1409 = vld [vmem:[%s1293 + $0x34] sm:$0xff]
      %v1410 = vld [vmem:[%s1293 + $0x44] sm:$0xff]
      %v1411 = vld [vmem:[%s1293 + $0x54] sm:$0xff]
      %v1412 = vld [vmem:[%s1293 + $0x64] sm:$0xff]
      %v1413 = vld [vmem:[%s1293 + $0x74] sm:$0xff]
      %v1414 = vlaneseq
      %v1415 = vshrl.u32 %v1414, 7
      %v1416 = vsub.s32 4, %v1415
      %v1417 = vrot.slane %v81, %v1416
      %v1418 = vmul.f32 %v1406, %v1417
      %v1419 = vmul.f32 %v1407, %v1417
      %v1420 = vmul.f32 %v1408, %v1417
      %v1421 = vmul.f32 %v1409, %v1417
      %v1422 = vmul.f32 %v1410, %v1417
      %v1423 = vmul.f32 %v1411, %v1417
      %v1424 = vmul.f32 %v1412, %v1417
      %v1425 = vmul.f32 %v1413, %v1417
      %v1426 = vadd.f32 %v1398, %v1418
      %v1427 = vadd.f32 %v1399, %v1419
      %v1428 = vadd.f32 %v1400, %v1420
      %v1429 = vadd.f32 %v1401, %v1421
      %v1430 = vadd.f32 %v1402, %v1422
      %v1431 = vadd.f32 %v1403, %v1423
      %v1432 = vadd.f32 %v1404, %v1424
      %v1433 = vadd.f32 %v1405, %v1425
      %v1434 = vld [vmem:[%s1293 + $0x5] sm:$0xff]
      %v1435 = vld [vmem:[%s1293 + $0x15] sm:$0xff]
      %v1436 = vld [vmem:[%s1293 + $0x25] sm:$0xff]
      %v1437 = vld [vmem:[%s1293 + $0x35] sm:$0xff]
      %v1438 = vld [vmem:[%s1293 + $0x45] sm:$0xff]
      %v1439 = vld [vmem:[%s1293 + $0x55] sm:$0xff]
      %v1440 = vld [vmem:[%s1293 + $0x65] sm:$0xff]
      %v1441 = vld [vmem:[%s1293 + $0x75] sm:$0xff]
      %v1442 = vlaneseq
      %v1443 = vshrl.u32 %v1442, 7
      %v1444 = vsub.s32 5, %v1443
      %v1445 = vrot.slane %v81, %v1444
      %v1446 = vmul.f32 %v1434, %v1445
      %v1447 = vmul.f32 %v1435, %v1445
      %v1448 = vmul.f32 %v1436, %v1445
      %v1449 = vmul.f32 %v1437, %v1445
      %v1450 = vmul.f32 %v1438, %v1445
      %v1451 = vmul.f32 %v1439, %v1445
      %v1452 = vmul.f32 %v1440, %v1445
      %v1453 = vmul.f32 %v1441, %v1445
      %v1454 = vadd.f32 %v1426, %v1446
      %v1455 = vadd.f32 %v1427, %v1447
      %v1456 = vadd.f32 %v1428, %v1448
      %v1457 = vadd.f32 %v1429, %v1449
      %v1458 = vadd.f32 %v1430, %v1450
      %v1459 = vadd.f32 %v1431, %v1451
      %v1460 = vadd.f32 %v1432, %v1452
      %v1461 = vadd.f32 %v1433, %v1453
      %v1462 = vld [vmem:[%s1293 + $0x6] sm:$0xff]
      %v1463 = vld [vmem:[%s1293 + $0x16] sm:$0xff]
      %v1464 = vld [vmem:[%s1293 + $0x26] sm:$0xff]
      %v1465 = vld [vmem:[%s1293 + $0x36] sm:$0xff]
      %v1466 = vld [vmem:[%s1293 + $0x46] sm:$0xff]
      %v1467 = vld [vmem:[%s1293 + $0x56] sm:$0xff]
      %v1468 = vld [vmem:[%s1293 + $0x66] sm:$0xff]
      %v1469 = vld [vmem:[%s1293 + $0x76] sm:$0xff]
      %v1470 = vlaneseq
      %v1471 = vshrl.u32 %v1470, 7
      %v1472 = vsub.s32 6, %v1471
      %v1473 = vrot.slane %v81, %v1472
      %v1474 = vmul.f32 %v1462, %v1473
      %v1475 = vmul.f32 %v1463, %v1473
      %v1476 = vmul.f32 %v1464, %v1473
      %v1477 = vmul.f32 %v1465, %v1473
      %v1478 = vmul.f32 %v1466, %v1473
      %v1479 = vmul.f32 %v1467, %v1473
      %v1480 = vmul.f32 %v1468, %v1473
      %v1481 = vmul.f32 %v1469, %v1473
      %v1482 = vadd.f32 %v1454, %v1474
      %v1483 = vadd.f32 %v1455, %v1475
      %v1484 = vadd.f32 %v1456, %v1476
      %v1485 = vadd.f32 %v1457, %v1477
      %v1486 = vadd.f32 %v1458, %v1478
      %v1487 = vadd.f32 %v1459, %v1479
      %v1488 = vadd.f32 %v1460, %v1480
      %v1489 = vadd.f32 %v1461, %v1481
      %s1490 = scalar_lea.vmem [#allocation8], %s89
      %1491 = vst.msk [vmem:[%s1490] sm:$0xff] %vm43, %v1482
      %1492 = vst.msk [vmem:[%s1490 + $0x8] sm:$0xff] %vm43, %v1483
      %1493 = vst.msk [vmem:[%s1490 + $0x10] sm:$0xff] %vm43, %v1484
      %1494 = vst.msk [vmem:[%s1490 + $0x18] sm:$0xff] %vm43, %v1485
      %1495 = vst.msk [vmem:[%s1490 + $0x20] sm:$0xff] %vm43, %v1486
      %1496 = vst.msk [vmem:[%s1490 + $0x28] sm:$0xff] %vm43, %v1487
      %1497 = vst.msk [vmem:[%s1490 + $0x30] sm:$0xff] %vm43, %v1488
      %1498 = vst.msk [vmem:[%s1490 + $0x38] sm:$0xff] %vm43, %v1489
    $region26: #{tpu_custom_call.1} parent=1 // loop_footer
      %s88 = sadd.s32 1, %s84
    $region27: #{tpu_custom_call.1} parent=1 // loop_footer_branch
      %83 = sbr.rel target = $region23
    $region28: #{tpu_custom_call.1} parent=1 // loop_exit
      _
    // Predicated region
    $region29: #{tpu_custom_call.1} parent=1 // pred_check
      _
    $region30: #{tpu_custom_call.1} parent=1 // pred_check_branch
      %1500 = sbr.rel (0) target = $region32
    $region31: #{tpu_custom_call.1} parent=1 // pred_region
      %s1502 = ssub.s32 2048, 2048
      %1503 = vsyncadd [#allocation5], %s1502
      %s1504 = sshll.u32 [#allocation8], 4
      %s1505 = int_to_ptr.vmem [resolvable:$true] %s1504
      %1510 = dma.vmem_to_hbm [thread:$0]  %s1505, 2048, %s3, [#allocation5], 128, 128, 8
    $region32: #{tpu_custom_call.1} parent=1 // pred_fallthru
      _
    // Predicated region
    $region33: #{tpu_custom_call.1} parent=1 // pred_check
      _
    $region34: #{tpu_custom_call.1} parent=1 // pred_check_branch
      %1512 = sbr.rel (0) target = $region36
    $region35: #{tpu_custom_call.1} parent=1 // pred_region
      %1513 = dma.done [#allocation5], 2048
    $region36: #{tpu_custom_call.1} parent=1 // pred_fallthru
      _
    %1514 = vsyncpa [#allocation4], 1
    %1515 = vsyncpa [#allocation7], 1
    %1516 = vsyncpa [#allocation5], 1

</llo_original>
